<compile_context>
chip_gen: v6e
topology: v6e:2x2x1
jax: 0.10.0
libtpu: 0.0.40
codegen_flags: <defaults>
</compile_context>

<pallas_src>
import functools

import jax
import jax.numpy as jnp
import numpy as np
from jax.experimental import pallas as pl
from jax.experimental.pallas import tpu as pltpu


# ----------------------------------------------------------------------------
# Kernel
# ----------------------------------------------------------------------------
def gnn_cell_kernel(
    a_in_ref,       # (Bblk, Np, Np)   matmul dtype (bf16 by default)
    a_out_ref,      # (Bblk, Np, Np)
    h_ref,          # (Bblk, Np, Hp)   f32
    w1_t_ref,       # (Hp, 5Hp)        [W_edge_in^T | W_edge_out^T | W_hh^T] padded
    b1_ref,         # (1, 5Hp)         [b_edge_in | b_edge_out | b_hh] padded, f32
    wih_in_t_ref,   # (Hp, 3Hp)        w_ih[:, :H]^T, per-gate column blocks
    wih_out_t_ref,  # (Hp, 3Hp)        w_ih[:, H:2H]^T, per-gate column blocks
    bih_ref,        # (1, 3Hp)         f32
    biah_ref,       # (1, Hp)          f32
    boah_ref,       # (1, Hp)          f32
    out_ref,        # (Bblk, Np, Hp)   f32
    *,
    step,
):
    bblk, n, hp = h_ref.shape
    rows = bblk * n

    # Load adjacency and weights once; they are reused by every step.
    a_in = a_in_ref[...]
    a_out = a_out_ref[...]
    mm_dtype = a_in.dtype

    w1_t = w1_t_ref[...]
    wih_in_t = wih_in_t_ref[...]
    wih_out_t = wih_out_t_ref[...]
    b1 = b1_ref[...]
    b_ih = bih_ref[...]
    b_iah = biah_ref[...]
    b_oah = boah_ref[...]

    def cell(h2):
        # h2: (rows, Hp) f32
        h_mm = h2.astype(mm_dtype)

        # One fused row-matmul: [edge_in | edge_out | gh] = h @ [Win^T|Wout^T|Whh^T].
        big = jnp.dot(h_mm, w1_t, preferred_element_type=jnp.float32) + b1
        edge_in = big[:, :hp]
        edge_out = big[:, hp:2 * hp]
        gh = big[:, 2 * hp:]

        # Adjacency aggregation: batched (Np,Np) @ (Np,Hp) per batch element.
        ein = edge_in.astype(mm_dtype).reshape(bblk, n, hp)
        eout = edge_out.astype(mm_dtype).reshape(bblk, n, hp)
        input_in = jnp.einsum("bnm,bmh->bnh", a_in, ein,
                              preferred_element_type=jnp.float32)
        input_out = jnp.einsum("bnm,bmh->bnh", a_out, eout,
                               preferred_element_type=jnp.float32)
        input_in = input_in.reshape(rows, hp) + b_iah
        input_out = input_out.reshape(rows, hp) + b_oah

        # gi = concat([input_in, input_out], -1) @ w_ih^T + b_ih, expressed as
        # the sum of two matmuls (no in-kernel lane concat).
        gi = (
            jnp.dot(input_in.astype(mm_dtype), wih_in_t,
                    preferred_element_type=jnp.float32)
            + jnp.dot(input_out.astype(mm_dtype), wih_out_t,
                      preferred_element_type=jnp.float32)
            + b_ih
        )

        # Hp is a multiple of 128, so these lane slices are vreg-aligned.
        i_r, i_i, i_n = gi[:, :hp], gi[:, hp:2 * hp], gi[:, 2 * hp:]
        h_r, h_i, h_n = gh[:, :hp], gh[:, hp:2 * hp], gh[:, 2 * hp:]

        resetgate = jax.nn.sigmoid(i_r + h_r)
        inputgate = jax.nn.sigmoid(i_i + h_i)
        newgate = jnp.tanh(i_n + resetgate * h_n)
        return newgate + inputgate * (h2 - newgate)

    h2 = h_ref[...].reshape(rows, hp)
    if step == 1:
        h2 = cell(h2)
    else:
        # fori_loop (not a Python for) bounds live ranges for multi-step runs.
        h2 = jax.lax.fori_loop(0, step, lambda _, h: cell(h), h2)
    out_ref[...] = h2.reshape(bblk, n, hp)


# ----------------------------------------------------------------------------
# Wrapper
# ----------------------------------------------------------------------------
def _round_up(x, m):
    return ((x + m - 1) // m) * m


def _pad_last(x, hp):
    h = x.shape[-1]
    if hp == h:
        return x
    pad = [(0, 0)] * (x.ndim - 1) + [(0, hp - h)]
    return jnp.pad(x, pad)


def _choose_bblk(B, Np, Hp, a_itemsize):
    # Target Bblk*Np >= 256 rows (fills v6e/v7x 256-wide MXU; >= 128 for v5e).
    target = max(1, -(-256 // Np))
    # Keep the double-buffered per-step I/O well under v7x's 64 MiB VMEM.
    per_b = 2 * Np * Np * a_itemsize + 2 * Np * Hp * 4   # A_in+A_out, hidden+out
    budget = 16 * 1024 * 1024
    cap = max(1, budget // max(1, 2 * per_b))
    bblk = int(max(1, min(B, target, cap)))
    # v7x has 2 TensorCores: keep >= 2 parallel grid steps when it costs nothing.
    if bblk == B and B % 2 == 0 and (B // 2) * Np >= 256:
        bblk = B // 2
    return bblk


def _prepare_operands(A, hidden, params, matmul_dtype):
    """Split A, pad H->Hp and N->Np, transpose/pad/fuse weights (done once)."""
    B, N, H = hidden.shape
    assert A.shape == (B, N, 2 * N)
    Hp = _round_up(H, 128)
    Np = _round_up(N, 8)

    a_in = A[:, :, :N]
    a_out = A[:, :, N:2 * N]
    if Np != N:
        padn = [(0, 0), (0, Np - N), (0, Np - N)]
        a_in = jnp.pad(a_in, padn)
        a_out = jnp.pad(a_out, padn)
        hidden = jnp.pad(hidden, [(0, 0), (0, Np - N), (0, 0)])
    a_in = a_in.astype(matmul_dtype)
    a_out = a_out.astype(matmul_dtype)
    h_pad = _pad_last(hidden.astype(jnp.float32), Hp)

    def pad_sq(w):                       # (H,H) weight -> W^T padded (Hp,Hp)
        out = jnp.zeros((Hp, Hp), jnp.float32).at[:H, :H].set(w.T)
        return out.astype(matmul_dtype)

    def pad_vec(b):                      # (H,) -> (1, Hp) f32
        return jnp.zeros((1, Hp), jnp.float32).at[0, :H].set(b)

    def pad_gate_w(w_t):                 # (H, 3H) -> (Hp, 3Hp), per-gate blocks
        out = jnp.zeros((Hp, 3 * Hp), jnp.float32)
        for g in range(3):
            out = out.at[:H, g * Hp:g * Hp + H].set(w_t[:, g * H:(g + 1) * H])
        return out.astype(matmul_dtype)

    def pad_gate_b(b):                   # (3H,) -> (1, 3Hp) f32
        out = jnp.zeros((1, 3 * Hp), jnp.float32)
        for g in range(3):
            out = out.at[0, g * Hp:g * Hp + H].set(b[g * H:(g + 1) * H])
        return out

    w_ih = params["w_ih"]
    # Fused row-matmul weight: [W_edge_in^T | W_edge_out^T | W_hh^T]  (Hp, 5Hp)
    w1_t = jnp.concatenate(
        [pad_sq(params["w_edge_in"]),
         pad_sq(params["w_edge_out"]),
         pad_gate_w(params["w_hh"].T)], axis=1)
    b1 = jnp.concatenate(
        [pad_vec(params["b_edge_in"]),
         pad_vec(params["b_edge_out"]),
         pad_gate_b(params["b_hh"])], axis=1)

    weights = (
        w1_t, b1,
        pad_gate_w(w_ih[:, :H].T), pad_gate_w(w_ih[:, H:2 * H].T),
        pad_gate_b(params["b_ih"]),
        pad_vec(params["b_iah"]), pad_vec(params["b_oah"]),
    )
    return a_in, a_out, h_pad, weights, Np, Hp


def attention_gnn_forward(A, hidden, params, step=1, matmul_dtype=jnp.bfloat16):
    B, N, H = hidden.shape
    a_in, a_out, h_pad, weights, Np, Hp = _prepare_operands(
        A, hidden, params, matmul_dtype)
    a_itemsize = np.dtype(matmul_dtype).itemsize

    bblk = _choose_bblk(B, Np, Hp, a_itemsize)
    Bp = _round_up(B, bblk)
    if Bp != B:
        padb = [(0, Bp - B), (0, 0), (0, 0)]
        a_in = jnp.pad(a_in, padb)
        a_out = jnp.pad(a_out, padb)
        h_pad = jnp.pad(h_pad, padb)

    grid = (Bp // bblk,)

    def batched(block_shape):
        return pl.BlockSpec(block_shape, lambda b: (b, 0, 0))

    def replicated(w):
        return pl.BlockSpec(w.shape, lambda b: (0, 0))

    in_specs = [
        batched((bblk, Np, Np)),      # A_in
        batched((bblk, Np, Np)),      # A_out
        batched((bblk, Np, Hp)),      # hidden (padded)
    ] + [replicated(w) for w in weights]
    out_spec = batched((bblk, Np, Hp))

    weight_bytes = sum(int(w.size) * w.dtype.itemsize for w in weights)
    flops = step * (
        Bp * Np * Hp * (5 * Hp) * 2         # fused edge_in + edge_out + gh
        + 2 * Bp * Np * Np * Hp * 2         # adjacency aggregation (in + out)
        + 2 * Bp * Np * Hp * (3 * Hp) * 2   # gi (two matmuls)
        + Bp * Np * Hp * 12                 # gate epilogue
    )
    cost = pl.CostEstimate(
        flops=int(flops),
        transcendentals=int(step * 3 * Bp * Np * Hp),
        bytes_accessed=int(2 * Bp * Np * Np * a_itemsize
                           + 2 * Bp * Np * Hp * 4
                           + weight_bytes),
    )

    io_bytes = 2 * bblk * (2 * Np * Np * a_itemsize + 2 * Np * Hp * 4)
    inter_bytes = 16 * bblk * Np * (3 * Hp) * 4
    vmem_limit = int(min(64 * 1024 * 1024,
                         max(32 * 1024 * 1024,
                             io_bytes + weight_bytes + inter_bytes + (4 << 20))))

    out = pl.pallas_call(
        functools.partial(gnn_cell_kernel, step=step),
        out_shape=jax.ShapeDtypeStruct((Bp, Np, Hp), jnp.float32),
        grid_spec=pltpu.PrefetchScalarGridSpec(
            num_scalar_prefetch=0,
            grid=grid,
            in_specs=in_specs,
            out_specs=out_spec,
        ),
        compiler_params=pltpu.CompilerParams(
            dimension_semantics=("parallel",),
            vmem_limit_bytes=vmem_limit,
        ),
        cost_estimate=cost,
    )(a_in, a_out, h_pad, *weights)

    return out[:B, :N, :H]


# ----------------------------------------------------------------------------
# Pure-JAX reference (mirrors the PyTorch GNNCell exactly) for validation.
# ----------------------------------------------------------------------------
def attention_gnn_reference(A, hidden, params, step=1):
    N = A.shape[1]
    H = hidden.shape[2]
    for _ in range(step):
        edge_in = hidden @ params["w_edge_in"].T + params["b_edge_in"]
        edge_out = hidden @ params["w_edge_out"].T + params["b_edge_out"]
        input_in = jnp.matmul(A[:, :, :N], edge_in) + params["b_iah"]
        input_out = jnp.matmul(A[:, :, N:2 * N], edge_out) + params["b_oah"]
        inputs = jnp.concatenate([input_in, input_out], axis=2)
        gi = inputs @ params["w_ih"].T + params["b_ih"]
        gh = hidden @ params["w_hh"].T + params["b_hh"]
        i_r, i_i, i_n = gi[..., :H], gi[..., H:2 * H], gi[..., 2 * H:]
        h_r, h_i, h_n = gh[..., :H], gh[..., H:2 * H], gh[..., 2 * H:]
        resetgate = jax.nn.sigmoid(i_r + h_r)
        inputgate = jax.nn.sigmoid(i_i + h_i)
        newgate = jnp.tanh(i_n + resetgate * h_n)
        hidden = newgate + inputgate * (hidden - newgate)
    return hidden


def init_params(key, hidden_size):
    H = hidden_size
    stdv = 1.0 / np.sqrt(H)
    names_shapes = [
        ("w_ih", (3 * H, 2 * H)),
        ("w_hh", (3 * H, H)),
        ("b_ih", (3 * H,)),
        ("b_hh", (3 * H,)),
        ("b_iah", (H,)),
        ("b_oah", (H,)),
        ("w_edge_in", (H, H)),
        ("b_edge_in", (H,)),
        ("w_edge_out", (H, H)),
        ("b_edge_out", (H,)),
        # linear_edge_f exists in __init__ but is unused in forward.
    ]
    keys = jax.random.split(key, len(names_shapes))
    return {
        name: jax.random.uniform(k, shape, jnp.float32, minval=-stdv, maxval=stdv)
        for (name, shape), k in zip(names_shapes, keys)
    }


if __name__ == "__main__":
    B, N, H = 2, 8, 32

    key = jax.random.PRNGKey(0)
    k_a, k_h, k_p = jax.random.split(key, 3)

    A = jax.random.uniform(k_a, (B, N, 2 * N), jnp.float32)
    hidden = jax.random.normal(k_h, (B, N, H), jnp.float32)
    params = init_params(k_p, H)

    # step = 1 (module default) ------------------------------------------------
    ref1 = jax.block_until_ready(attention_gnn_reference(A, hidden, params, step=1))

    out_bf16 = jax.block_until_ready(
        attention_gnn_forward(A, hidden, params, step=1,
                              matmul_dtype=jnp.bfloat16))
    np.testing.assert_allclose(np.asarray(out_bf16), np.asarray(ref1),
                               rtol=5e-2, atol=5e-2)

    out_f32 = jax.block_until_ready(
        attention_gnn_forward(A, hidden, params, step=1,
                              matmul_dtype=jnp.float32))
    np.testing.assert_allclose(np.asarray(out_f32), np.asarray(ref1),
                               rtol=1e-5, atol=1e-5)

    # step = 2 exercises the in-kernel recurrence (fori_loop path) --------------
    ref2 = jax.block_until_ready(attention_gnn_reference(A, hidden, params, step=2))
    out2_f32 = jax.block_until_ready(
        attention_gnn_forward(A, hidden, params, step=2,
                              matmul_dtype=jnp.float32))
    np.testing.assert_allclose(np.asarray(out2_f32), np.asarray(ref2),
                               rtol=1e-5, atol=1e-5)

    print("KERNEL_OK")
</pallas_src>

<mosaic_0001>
module attributes {stable_mosaic.version = 11 : i64} {
  func.func @gnn_cell_kernel(%arg0: i32, %arg1: memref<2x8x8xbf16, #tpu.memory_space<vmem>>, %arg2: memref<2x8x8xbf16, #tpu.memory_space<vmem>>, %arg3: memref<2x8x128xf32, #tpu.memory_space<vmem>>, %arg4: memref<128x640xbf16, #tpu.memory_space<vmem>>, %arg5: memref<1x640xf32, #tpu.memory_space<vmem>>, %arg6: memref<128x384xbf16, #tpu.memory_space<vmem>>, %arg7: memref<128x384xbf16, #tpu.memory_space<vmem>>, %arg8: memref<1x384xf32, #tpu.memory_space<vmem>>, %arg9: memref<1x128xf32, #tpu.memory_space<vmem>>, %arg10: memref<1x128xf32, #tpu.memory_space<vmem>>, %arg11: memref<2x8x128xf32, #tpu.memory_space<vmem>>) attributes {dimension_semantics = [#tpu.dimension_semantics<parallel>], iteration_bounds = array<i64: 1>, scalar_prefetch = 0 : i64, scratch_operands = 0 : i64, tpu.core_type = #tpu.core_type<tc>, window_params = [{transform_indices = @transform_0, window_bounds = array<i64: 2, 8, 8>}, {transform_indices = @transform_1, window_bounds = array<i64: 2, 8, 8>}, {transform_indices = @transform_2, window_bounds = array<i64: 2, 8, 128>}, {pipeline_mode = #tpu.pipeline_mode<synchronous>, transform_indices = @transform_3, window_bounds = array<i64: 128, 640>}, {pipeline_mode = #tpu.pipeline_mode<synchronous>, transform_indices = @transform_4, window_bounds = array<i64: 1, 640>}, {pipeline_mode = #tpu.pipeline_mode<synchronous>, transform_indices = @transform_5, window_bounds = array<i64: 128, 384>}, {pipeline_mode = #tpu.pipeline_mode<synchronous>, transform_indices = @transform_6, window_bounds = array<i64: 128, 384>}, {pipeline_mode = #tpu.pipeline_mode<synchronous>, transform_indices = @transform_7, window_bounds = array<i64: 1, 384>}, {pipeline_mode = #tpu.pipeline_mode<synchronous>, transform_indices = @transform_8, window_bounds = array<i64: 1, 128>}, {pipeline_mode = #tpu.pipeline_mode<synchronous>, transform_indices = @transform_9, window_bounds = array<i64: 1, 128>}, {transform_indices = @transform_10, window_bounds = array<i64: 2, 8, 128>}]} {
    %c0 = arith.constant 0 : index
    %c0_0 = arith.constant 0 : index
    %c0_1 = arith.constant 0 : index
    %0 = vector.load %arg1[%c0, %c0_0, %c0_1] : memref<2x8x8xbf16, #tpu.memory_space<vmem>>, vector<2x8x8xbf16>
    %c0_2 = arith.constant 0 : index
    %c0_3 = arith.constant 0 : index
    %c0_4 = arith.constant 0 : index
    %1 = vector.load %arg2[%c0_2, %c0_3, %c0_4] : memref<2x8x8xbf16, #tpu.memory_space<vmem>>, vector<2x8x8xbf16>
    %c0_5 = arith.constant 0 : index
    %c0_6 = arith.constant 0 : index
    %2 = vector.load %arg4[%c0_5, %c0_6] : memref<128x640xbf16, #tpu.memory_space<vmem>>, vector<128x640xbf16>
    %c0_7 = arith.constant 0 : index
    %c0_8 = arith.constant 0 : index
    %3 = vector.load %arg6[%c0_7, %c0_8] : memref<128x384xbf16, #tpu.memory_space<vmem>>, vector<128x384xbf16>
    %c0_9 = arith.constant 0 : index
    %c0_10 = arith.constant 0 : index
    %4 = vector.load %arg7[%c0_9, %c0_10] : memref<128x384xbf16, #tpu.memory_space<vmem>>, vector<128x384xbf16>
    %c0_11 = arith.constant 0 : index
    %c0_12 = arith.constant 0 : index
    %5 = vector.load %arg5[%c0_11, %c0_12] : memref<1x640xf32, #tpu.memory_space<vmem>>, vector<1x640xf32>
    %c0_13 = arith.constant 0 : index
    %c0_14 = arith.constant 0 : index
    %6 = vector.load %arg8[%c0_13, %c0_14] : memref<1x384xf32, #tpu.memory_space<vmem>>, vector<1x384xf32>
    %c0_15 = arith.constant 0 : index
    %c0_16 = arith.constant 0 : index
    %7 = vector.load %arg9[%c0_15, %c0_16] : memref<1x128xf32, #tpu.memory_space<vmem>>, vector<1x128xf32>
    %c0_17 = arith.constant 0 : index
    %c0_18 = arith.constant 0 : index
    %8 = vector.load %arg10[%c0_17, %c0_18] : memref<1x128xf32, #tpu.memory_space<vmem>>, vector<1x128xf32>
    %c0_19 = arith.constant 0 : index
    %c0_20 = arith.constant 0 : index
    %c0_21 = arith.constant 0 : index
    %9 = vector.load %arg3[%c0_19, %c0_20, %c0_21] : memref<2x8x128xf32, #tpu.memory_space<vmem>>, vector<2x8x128xf32>
    %10 = vector.shape_cast %9 : vector<2x8x128xf32> to vector<16x128xf32>
    %11 = arith.truncf %10 : vector<16x128xf32> to vector<16x128xbf16>
    %cst = arith.constant dense<0.000000e+00> : vector<16x640xf32>
    %12 = tpu.matmul %11, %2, %cst {dimension_numbers = #tpu.dot_dimension_numbers<[1], [0], [0], [1], [0, 0, 1, 1], [], []>} : vector<16x128xbf16>, vector<128x640xbf16>, vector<16x640xf32> -> vector<16x640xf32>
    %13 = vector.broadcast %5 : vector<1x640xf32> to vector<16x640xf32>
    %14 = arith.addf %12, %13 : vector<16x640xf32>
    %15 = vector.extract_strided_slice %14 {offsets = [0, 0], sizes = [16, 128], strides = [1, 1]} : vector<16x640xf32> to vector<16x128xf32>
    %16 = vector.extract_strided_slice %14 {offsets = [0, 128], sizes = [16, 128], strides = [1, 1]} : vector<16x640xf32> to vector<16x128xf32>
    %17 = vector.extract_strided_slice %14 {offsets = [0, 256], sizes = [16, 384], strides = [1, 1]} : vector<16x640xf32> to vector<16x384xf32>
    %18 = arith.truncf %15 : vector<16x128xf32> to vector<16x128xbf16>
    %19 = vector.shape_cast %18 : vector<16x128xbf16> to vector<2x8x128xbf16>
    %20 = arith.truncf %16 : vector<16x128xf32> to vector<16x128xbf16>
    %21 = vector.shape_cast %20 : vector<16x128xbf16> to vector<2x8x128xbf16>
    "tpu.trace_start"() <{level = 10 : i32, message = "bnm,bmh->bnh"}> : () -> ()
    %cst_22 = arith.constant dense<0.000000e+00> : vector<2x8x128xf32>
    %22 = tpu.matmul %0, %19, %cst_22 {dimension_numbers = #tpu.dot_dimension_numbers<[2], [1], [1], [2], [0, 0, 0, 1, 1, 2], [0], [0]>} : vector<2x8x8xbf16>, vector<2x8x128xbf16>, vector<2x8x128xf32> -> vector<2x8x128xf32>
    %cst_23 = arith.constant dense<0.000000e+00> : vector<2x8x128xf32>
    %23 = tpu.matmul %1, %21, %cst_23 {dimension_numbers = #tpu.dot_dimension_numbers<[2], [1], [1], [2], [0, 0, 0, 1, 1, 2], [0], [0]>} : vector<2x8x8xbf16>, vector<2x8x128xbf16>, vector<2x8x128xf32> -> vector<2x8x128xf32>
    "tpu.trace_stop"() : () -> ()
    %24 = vector.shape_cast %22 : vector<2x8x128xf32> to vector<16x128xf32>
    %25 = vector.broadcast %7 : vector<1x128xf32> to vector<16x128xf32>
    %26 = arith.addf %24, %25 : vector<16x128xf32>
    %27 = vector.shape_cast %23 : vector<2x8x128xf32> to vector<16x128xf32>
    %28 = vector.broadcast %8 : vector<1x128xf32> to vector<16x128xf32>
    %29 = arith.addf %27, %28 : vector<16x128xf32>
    %30 = arith.truncf %26 : vector<16x128xf32> to vector<16x128xbf16>
    %cst_24 = arith.constant dense<0.000000e+00> : vector<16x384xf32>
    %31 = tpu.matmul %30, %3, %cst_24 {dimension_numbers = #tpu.dot_dimension_numbers<[1], [0], [0], [1], [0, 0, 1, 1], [], []>} : vector<16x128xbf16>, vector<128x384xbf16>, vector<16x384xf32> -> vector<16x384xf32>
    %32 = arith.truncf %29 : vector<16x128xf32> to vector<16x128xbf16>
    %cst_25 = arith.constant dense<0.000000e+00> : vector<16x384xf32>
    %33 = tpu.matmul %32, %4, %cst_25 {dimension_numbers = #tpu.dot_dimension_numbers<[1], [0], [0], [1], [0, 0, 1, 1], [], []>} : vector<16x128xbf16>, vector<128x384xbf16>, vector<16x384xf32> -> vector<16x384xf32>
    %34 = arith.addf %31, %33 : vector<16x384xf32>
    %35 = vector.broadcast %6 : vector<1x384xf32> to vector<16x384xf32>
    %36 = arith.addf %34, %35 : vector<16x384xf32>
    %37 = vector.extract_strided_slice %36 {offsets = [0, 0], sizes = [16, 128], strides = [1, 1]} : vector<16x384xf32> to vector<16x128xf32>
    %38 = vector.extract_strided_slice %36 {offsets = [0, 128], sizes = [16, 128], strides = [1, 1]} : vector<16x384xf32> to vector<16x128xf32>
    %39 = vector.extract_strided_slice %36 {offsets = [0, 256], sizes = [16, 128], strides = [1, 1]} : vector<16x384xf32> to vector<16x128xf32>
    %40 = vector.extract_strided_slice %17 {offsets = [0, 0], sizes = [16, 128], strides = [1, 1]} : vector<16x384xf32> to vector<16x128xf32>
    %41 = vector.extract_strided_slice %17 {offsets = [0, 128], sizes = [16, 128], strides = [1, 1]} : vector<16x384xf32> to vector<16x128xf32>
    %42 = vector.extract_strided_slice %17 {offsets = [0, 256], sizes = [16, 128], strides = [1, 1]} : vector<16x384xf32> to vector<16x128xf32>
    %43 = arith.addf %37, %40 : vector<16x128xf32>
    %44 = arith.negf %43 : vector<16x128xf32>
    %45 = math.exp %44 : vector<16x128xf32>
    %cst_26 = arith.constant 1.000000e+00 : f32
    %46 = vector.broadcast %cst_26 : f32 to vector<16x128xf32>
    %47 = arith.addf %46, %45 : vector<16x128xf32>
    %48 = arith.divf %46, %47 : vector<16x128xf32>
    %49 = arith.addf %38, %41 : vector<16x128xf32>
    %50 = arith.negf %49 : vector<16x128xf32>
    %51 = math.exp %50 : vector<16x128xf32>
    %cst_27 = arith.constant 1.000000e+00 : f32
    %52 = vector.broadcast %cst_27 : f32 to vector<16x128xf32>
    %53 = arith.addf %52, %51 : vector<16x128xf32>
    %54 = arith.divf %52, %53 : vector<16x128xf32>
    %55 = arith.mulf %48, %42 : vector<16x128xf32>
    %56 = arith.addf %39, %55 : vector<16x128xf32>
    %57 = math.tanh %56 : vector<16x128xf32>
    %58 = arith.subf %10, %57 : vector<16x128xf32>
    %59 = arith.mulf %54, %58 : vector<16x128xf32>
    %60 = arith.addf %57, %59 : vector<16x128xf32>
    %61 = vector.shape_cast %60 : vector<16x128xf32> to vector<2x8x128xf32>
    %c0_28 = arith.constant 0 : index
    %c0_29 = arith.constant 0 : index
    %c0_30 = arith.constant 0 : index
    %62 = vector.load %arg11[%c0_28, %c0_29, %c0_30] : memref<2x8x128xf32, #tpu.memory_space<vmem>>, vector<2x8x128xf32>
    tpu.vector_store %arg11[%c0_28, %c0_29, %c0_30], %61 {strides = array<i32>} : memref<2x8x128xf32, #tpu.memory_space<vmem>>, vector<2x8x128xf32>,
    return
  }
  func.func @transform_0(%arg0: i32) -> (i32, i32, i32) {
    %c0_i32 = arith.constant 0 : i32
    %c0_i32_0 = arith.constant 0 : i32
    %c0_i32_1 = arith.constant 0 : i32
    return %arg0, %c0_i32, %c0_i32_0 : i32, i32, i32
  }
  func.func @transform_1(%arg0: i32) -> (i32, i32, i32) {
    %c0_i32 = arith.constant 0 : i32
    %c0_i32_0 = arith.constant 0 : i32
    %c0_i32_1 = arith.constant 0 : i32
    return %arg0, %c0_i32, %c0_i32_0 : i32, i32, i32
  }
  func.func @transform_2(%arg0: i32) -> (i32, i32, i32) {
    %c0_i32 = arith.constant 0 : i32
    %c0_i32_0 = arith.constant 0 : i32
    %c0_i32_1 = arith.constant 0 : i32
    return %arg0, %c0_i32, %c0_i32_0 : i32, i32, i32
  }
  func.func @transform_3(%arg0: i32) -> (i32, i32) {
    %c0_i32 = arith.constant 0 : i32
    %c0_i32_0 = arith.constant 0 : i32
    %c0_i32_1 = arith.constant 0 : i32
    return %c0_i32, %c0_i32_0 : i32, i32
  }
  func.func @transform_4(%arg0: i32) -> (i32, i32) {
    %c0_i32 = arith.constant 0 : i32
    %c0_i32_0 = arith.constant 0 : i32
    %c0_i32_1 = arith.constant 0 : i32
    return %c0_i32, %c0_i32_0 : i32, i32
  }
  func.func @transform_5(%arg0: i32) -> (i32, i32) {
    %c0_i32 = arith.constant 0 : i32
    %c0_i32_0 = arith.constant 0 : i32
    %c0_i32_1 = arith.constant 0 : i32
    return %c0_i32, %c0_i32_0 : i32, i32
  }
  func.func @transform_6(%arg0: i32) -> (i32, i32) {
    %c0_i32 = arith.constant 0 : i32
    %c0_i32_0 = arith.constant 0 : i32
    %c0_i32_1 = arith.constant 0 : i32
    return %c0_i32, %c0_i32_0 : i32, i32
  }
  func.func @transform_7(%arg0: i32) -> (i32, i32) {
    %c0_i32 = arith.constant 0 : i32
    %c0_i32_0 = arith.constant 0 : i32
    %c0_i32_1 = arith.constant 0 : i32
    return %c0_i32, %c0_i32_0 : i32, i32
  }
  func.func @transform_8(%arg0: i32) -> (i32, i32) {
    %c0_i32 = arith.constant 0 : i32
    %c0_i32_0 = arith.constant 0 : i32
    %c0_i32_1 = arith.constant 0 : i32
    return %c0_i32, %c0_i32_0 : i32, i32
  }
  func.func @transform_9(%arg0: i32) -> (i32, i32) {
    %c0_i32 = arith.constant 0 : i32
    %c0_i32_0 = arith.constant 0 : i32
    %c0_i32_1 = arith.constant 0 : i32
    return %c0_i32, %c0_i32_0 : i32, i32
  }
  func.func @transform_10(%arg0: i32) -> (i32, i32, i32) {
    %c0_i32 = arith.constant 0 : i32
    %c0_i32_0 = arith.constant 0 : i32
    %c0_i32_1 = arith.constant 0 : i32
    return %arg0, %c0_i32, %c0_i32_0 : i32, i32, i32
  }
}

</mosaic_0001>

<llo_original>
// kernel: tpu_custom_call.1
$region0: #{tpu_custom_call.1}
  #allocation0 [shape = 'u32[]', space=smem, size = 0x4, offset = 0x4, fixed_abs, tag = 'smem constant byte address 0x4 - core index']
  #allocation1 [shape = 'u32[144,128]{1,0:T(1,128)}', space=vmem, size = 0x12000, scoped, tag = 'internal scratch']
  %s0 = inlined_call_operand.hbm [shape: bf16[2,8,8], index: 0, kind: input, shape index: {}]
  %s1 = inlined_call_operand.hbm [shape: bf16[2,8,8], index: 1, kind: input, shape index: {}]
  %s2 = inlined_call_operand.hbm [shape: f32[2,8,128], index: 2, kind: input, shape index: {}]
  %s3 = inlined_call_operand.hbm [shape: bf16[128,640], index: 3, kind: input, shape index: {}]
  %s4 = inlined_call_operand.vmem [shape: f32[1,640], index: 4, kind: input, shape index: {}]
  %s5 = inlined_call_operand.hbm [shape: bf16[128,384], index: 5, kind: input, shape index: {}]
  %s6 = inlined_call_operand.hbm [shape: bf16[128,384], index: 6, kind: input, shape index: {}]
  %s7 = inlined_call_operand.vmem [shape: f32[1,384], index: 7, kind: input, shape index: {}]
  %s8 = inlined_call_operand.vmem [shape: f32[1,128], index: 8, kind: input, shape index: {}]
  %s9 = inlined_call_operand.vmem [shape: f32[1,128], index: 9, kind: input, shape index: {}]
  %s10 = inlined_call_operand.hbm [shape: f32[2,8,128], index: 10, kind: output, shape index: {}]
  %s11 = sld [smem:[#allocation0]]
  $region74: #{tpu_custom_call.1} parent=0
    _
  %s13 = ssub.s32 1, %s11
  %s14 = scalar_select 0, %s13, %s11
  $region1: #{tpu_custom_call.1} parent=0
    #allocation2 [shape = 'u8[4096]{0}', space=vmem, size = 0x1000, scoped, tag = 'input window, operand 0, single buffered']
    #allocation3 [shape = 's32[1]{0}', space=sflag, size = 0x4, scoped, tag = 'scoped memory for tpu_custom_call.1']
    #allocation4 [shape = 's32[1]{0}', space=sflag, size = 0x4, scoped, tag = 'scoped memory for tpu_custom_call.1']
    #allocation5 [shape = 'u8[4096]{0}', space=vmem, size = 0x1000, scoped, tag = 'input window, operand 1, single buffered']
    #allocation6 [shape = 's32[1]{0}', space=sflag, size = 0x4, scoped, tag = 'scoped memory for tpu_custom_call.1']
    #allocation7 [shape = 'u8[8192]{0}', space=vmem, size = 0x2000, scoped, tag = 'input window, operand 2, single buffered']
    #allocation8 [shape = 'u8[163840]{0}', space=vmem, size = 0x28000, scoped, tag = 'input window, operand 3, single buffered']
    #allocation9 [shape = 's32[1]{0}', space=sflag, size = 0x4, scoped, tag = 'scoped memory for tpu_custom_call.1']
    #allocation10 [shape = 'u8[98304]{0}', space=vmem, size = 0x18000, scoped, tag = 'input window, operand 5, single buffered']
    #allocation11 [shape = 'u8[98304]{0}', space=vmem, size = 0x18000, scoped, tag = 'input window, operand 6, single buffered']
    #allocation12 [shape = 's32[1]{0}', space=sflag, size = 0x4, scoped, tag = 'scoped memory for tpu_custom_call.1']
    #allocation13 [shape = 'u8[8192]{0}', space=vmem, size = 0x2000, scoped, tag = 'output window, operand 0, single buffered']
    %15 = vsyncpa [#allocation3], 0
    %16 = vsyncpa [#allocation6], 0
    %17 = vsyncpa [#allocation9], 0
    %18 = vsyncpa [#allocation12], 0
    %19 = vsyncpa [#allocation4], 0
    // Predicated region
    $region2: #{tpu_custom_call.1} parent=1 // pred_check
      _
    $region3: #{tpu_custom_call.1} parent=1 // pred_check_branch
      %21 = sbr.rel (0) target = $region5
    $region4: #{tpu_custom_call.1} parent=1 // pred_region
      %s23 = ssub.s32 128, 128
      %24 = vsyncadd [#allocation3], %s23
      %s25 = sshll.u32 [#allocation2], 4
      %s26 = int_to_ptr.vmem [resolvable:$true] %s25
      %31 = dma.hbm_to_vmem [thread:$0]  %s0, 128, %s26, [#allocation3], 64, 64, 4
    $region5: #{tpu_custom_call.1} parent=1 // pred_fallthru
      _
    // Predicated region
    $region6: #{tpu_custom_call.1} parent=1 // pred_check
      _
    $region7: #{tpu_custom_call.1} parent=1 // pred_check_branch
      %33 = sbr.rel (0) target = $region9
    $region8: #{tpu_custom_call.1} parent=1 // pred_region
      %s35 = ssub.s32 128, 128
      %36 = vsyncadd [#allocation6], %s35
      %s37 = sshll.u32 [#allocation5], 4
      %s38 = int_to_ptr.vmem [resolvable:$true] %s37
      %43 = dma.hbm_to_vmem [thread:$0]  %s1, 128, %s38, [#allocation6], 64, 64, 4
    $region9: #{tpu_custom_call.1} parent=1 // pred_fallthru
      _
    // Predicated region
    $region10: #{tpu_custom_call.1} parent=1 // pred_check
      _
    $region11: #{tpu_custom_call.1} parent=1 // pred_check_branch
      %45 = sbr.rel (0) target = $region13
    $region12: #{tpu_custom_call.1} parent=1 // pred_region
      %s47 = ssub.s32 256, 256
      %48 = vsyncadd [#allocation6], %s47
      %s49 = sshll.u32 [#allocation7], 4
      %s50 = int_to_ptr.vmem [resolvable:$true] %s49
      %55 = dma.hbm_to_vmem [thread:$0]  %s2, 256, %s50, [#allocation6], 128, 128, 8
    $region13: #{tpu_custom_call.1} parent=1 // pred_fallthru
      _
    // Predicated region
    $region14: #{tpu_custom_call.1} parent=1 // pred_check
      _
    $region15: #{tpu_custom_call.1} parent=1 // pred_check_branch
      %57 = sbr.rel (0) target = $region17
    $region16: #{tpu_custom_call.1} parent=1 // pred_region
      %s59 = ssub.s32 5120, 5120
      %60 = vsyncadd [#allocation9], %s59
      %s61 = sshll.u32 [#allocation8], 4
      %s62 = int_to_ptr.vmem [resolvable:$true] %s61
      %67 = dma.hbm_to_vmem [thread:$0]  %s3, 5120, %s62, [#allocation9], 320, 320, 20
    $region17: #{tpu_custom_call.1} parent=1 // pred_fallthru
      _
    // Predicated region
    $region18: #{tpu_custom_call.1} parent=1 // pred_check
      _
    $region19: #{tpu_custom_call.1} parent=1 // pred_check_branch
      %69 = sbr.rel (0) target = $region21
    $region20: #{tpu_custom_call.1} parent=1 // pred_region
      _
    $region21: #{tpu_custom_call.1} parent=1 // pred_fallthru
      _
    // Predicated region
    $region22: #{tpu_custom_call.1} parent=1 // pred_check
      _
    $region23: #{tpu_custom_call.1} parent=1 // pred_check_branch
      %71 = sbr.rel (0) target = $region25
    $region24: #{tpu_custom_call.1} parent=1 // pred_region
      %s73 = ssub.s32 3072, 3072
      %74 = vsyncadd [#allocation9], %s73
      %s75 = sshll.u32 [#allocation10], 4
      %s76 = int_to_ptr.vmem [resolvable:$true] %s75
      %81 = dma.hbm_to_vmem [thread:$0]  %s5, 3072, %s76, [#allocation9], 192, 192, 12
    $region25: #{tpu_custom_call.1} parent=1 // pred_fallthru
      _
    // Predicated region
    $region26: #{tpu_custom_call.1} parent=1 // pred_check
      _
    $region27: #{tpu_custom_call.1} parent=1 // pred_check_branch
      %83 = sbr.rel (0) target = $region29
    $region28: #{tpu_custom_call.1} parent=1 // pred_region
      %s85 = ssub.s32 3072, 3072
      %86 = vsyncadd [#allocation12], %s85
      %s87 = sshll.u32 [#allocation11], 4
      %s88 = int_to_ptr.vmem [resolvable:$true] %s87
      %93 = dma.hbm_to_vmem [thread:$0]  %s6, 3072, %s88, [#allocation12], 192, 192, 12
    $region29: #{tpu_custom_call.1} parent=1 // pred_fallthru
      _
    // Predicated region
    $region30: #{tpu_custom_call.1} parent=1 // pred_check
      _
    $region31: #{tpu_custom_call.1} parent=1 // pred_check_branch
      %95 = sbr.rel (0) target = $region33
    $region32: #{tpu_custom_call.1} parent=1 // pred_region
      _
    $region33: #{tpu_custom_call.1} parent=1 // pred_fallthru
      _
    // Predicated region
    $region34: #{tpu_custom_call.1} parent=1 // pred_check
      _
    $region35: #{tpu_custom_call.1} parent=1 // pred_check_branch
      %97 = sbr.rel (0) target = $region37
    $region36: #{tpu_custom_call.1} parent=1 // pred_region
      _
    $region37: #{tpu_custom_call.1} parent=1 // pred_fallthru
      _
    // Predicated region
    $region38: #{tpu_custom_call.1} parent=1 // pred_check
      _
    $region39: #{tpu_custom_call.1} parent=1 // pred_check_branch
      %99 = sbr.rel (0) target = $region41
    $region40: #{tpu_custom_call.1} parent=1 // pred_region
      _
    $region41: #{tpu_custom_call.1} parent=1 // pred_fallthru
      _
    // Predicated region
    $region42: #{tpu_custom_call.1} parent=1 // pred_check
      _
    $region43: #{tpu_custom_call.1} parent=1 // pred_check_branch
      %101 = sbr.rel (0) target = $region45
    $region44: #{tpu_custom_call.1} parent=1 // pred_region
      %102 = dma.done [#allocation3], 128
    $region45: #{tpu_custom_call.1} parent=1 // pred_fallthru
      _
    // Predicated region
    $region46: #{tpu_custom_call.1} parent=1 // pred_check
      _
    $region47: #{tpu_custom_call.1} parent=1 // pred_check_branch
      %104 = sbr.rel (0) target = $region49
    $region48: #{tpu_custom_call.1} parent=1 // pred_region
      %105 = dma.done [#allocation6], 128
    $region49: #{tpu_custom_call.1} parent=1 // pred_fallthru
      _
    // Predicated region
    $region50: #{tpu_custom_call.1} parent=1 // pred_check
      _
    $region51: #{tpu_custom_call.1} parent=1 // pred_check_branch
      %107 = sbr.rel (0) target = $region53
    $region52: #{tpu_custom_call.1} parent=1 // pred_region
      %108 = dma.done [#allocation6], 256
    $region53: #{tpu_custom_call.1} parent=1 // pred_fallthru
      _
    // Predicated region
    $region54: #{tpu_custom_call.1} parent=1 // pred_check
      _
    $region55: #{tpu_custom_call.1} parent=1 // pred_check_branch
      %110 = sbr.rel (0) target = $region57
    $region56: #{tpu_custom_call.1} parent=1 // pred_region
      %111 = dma.done [#allocation9], 5120
    $region57: #{tpu_custom_call.1} parent=1 // pred_fallthru
      _
    // Predicated region
    $region58: #{tpu_custom_call.1} parent=1 // pred_check
      _
    $region59: #{tpu_custom_call.1} parent=1 // pred_check_branch
      %113 = sbr.rel (0) target = $region61
    $region60: #{tpu_custom_call.1} parent=1 // pred_region
      %114 = dma.done [#allocation9], 3072
    $region61: #{tpu_custom_call.1} parent=1 // pred_fallthru
      _
    // Predicated region
    $region62: #{tpu_custom_call.1} parent=1 // pred_check
      _
    $region63: #{tpu_custom_call.1} parent=1 // pred_check_branch
      %116 = sbr.rel (0) target = $region65
    $region64: #{tpu_custom_call.1} parent=1 // pred_region
      %117 = dma.done [#allocation12], 3072
    $region65: #{tpu_custom_call.1} parent=1 // pred_fallthru
      _
    %v119 = vld [vmem:[#allocation2] sm:$0xf]
    %v120 = vld [vmem:[#allocation2 + $0x4] sm:$0xf]
    %v121 = vld [vmem:[#allocation5] sm:$0xf]
    %v122 = vld [vmem:[#allocation5 + $0x4] sm:$0xf]
    %v123 = vld [vmem:[#allocation8] sm:$0xff]
    %v124 = vld [vmem:[#allocation8 + $0x8] sm:$0xff]
    %v125 = vld [vmem:[#allocation8 + $0x10] sm:$0xf]
    %v126 = vld [vmem:[#allocation8 + $0x14] sm:$0xff]
    %v127 = vld [vmem:[#allocation8 + $0x1c] sm:$0xff]
    %v128 = vld [vmem:[#allocation8 + $0x24] sm:$0xf]
    %v129 = vld [vmem:[#allocation8 + $0x28] sm:$0xff]
    %v130 = vld [vmem:[#allocation8 + $0x30] sm:$0xff]
    %v131 = vld [vmem:[#allocation8 + $0x38] sm:$0xf]
    %v132 = vld [vmem:[#allocation8 + $0x3c] sm:$0xff]
    %v133 = vld [vmem:[#allocation8 + $0x44] sm:$0xff]
    %v134 = vld [vmem:[#allocation8 + $0x4c] sm:$0xf]
    %v135 = vld [vmem:[#allocation8 + $0x50] sm:$0xff]
    %v136 = vld [vmem:[#allocation8 + $0x58] sm:$0xff]
    %v137 = vld [vmem:[#allocation8 + $0x60] sm:$0xf]
    %v138 = vld [vmem:[#allocation8 + $0x64] sm:$0xff]
    %v139 = vld [vmem:[#allocation8 + $0x6c] sm:$0xff]
    %v140 = vld [vmem:[#allocation8 + $0x74] sm:$0xf]
    %v141 = vld [vmem:[#allocation8 + $0x78] sm:$0xff]
    %v142 = vld [vmem:[#allocation8 + $0x80] sm:$0xff]
    %v143 = vld [vmem:[#allocation8 + $0x88] sm:$0xf]
    %v144 = vld [vmem:[#allocation8 + $0x8c] sm:$0xff]
    %v145 = vld [vmem:[#allocation8 + $0x94] sm:$0xff]
    %v146 = vld [vmem:[#allocation8 + $0x9c] sm:$0xf]
    %v147 = vld [vmem:[#allocation8 + $0xa0] sm:$0xff]
    %v148 = vld [vmem:[#allocation8 + $0xa8] sm:$0xff]
    %v149 = vld [vmem:[#allocation8 + $0xb0] sm:$0xf]
    %v150 = vld [vmem:[#allocation8 + $0xb4] sm:$0xff]
    %v151 = vld [vmem:[#allocation8 + $0xbc] sm:$0xff]
    %v152 = vld [vmem:[#allocation8 + $0xc4] sm:$0xf]
    %v153 = vld [vmem:[#allocation8 + $0xc8] sm:$0xff]
    %v154 = vld [vmem:[#allocation8 + $0xd0] sm:$0xff]
    %v155 = vld [vmem:[#allocation8 + $0xd8] sm:$0xf]
    %v156 = vld [vmem:[#allocation8 + $0xdc] sm:$0xff]
    %v157 = vld [vmem:[#allocation8 + $0xe4] sm:$0xff]
    %v158 = vld [vmem:[#allocation8 + $0xec] sm:$0xf]
    %v159 = vld [vmem:[#allocation8 + $0xf0] sm:$0xff]
    %v160 = vld [vmem:[#allocation8 + $0xf8] sm:$0xff]
    %v161 = vld [vmem:[#allocation8 + $0x100] sm:$0xf]
    %v162 = vld [vmem:[#allocation8 + $0x104] sm:$0xff]
    %v163 = vld [vmem:[#allocation8 + $0x10c] sm:$0xff]
    %v164 = vld [vmem:[#allocation8 + $0x114] sm:$0xf]
    %v165 = vld [vmem:[#allocation8 + $0x118] sm:$0xff]
    %v166 = vld [vmem:[#allocation8 + $0x120] sm:$0xff]
    %v167 = vld [vmem:[#allocation8 + $0x128] sm:$0xf]
    %v168 = vld [vmem:[#allocation8 + $0x12c] sm:$0xff]
    %v169 = vld [vmem:[#allocation8 + $0x134] sm:$0xff]
    %v170 = vld [vmem:[#allocation8 + $0x13c] sm:$0xf]
    %v171 = vld [vmem:[#allocation10] sm:$0xff]
    %v172 = vld [vmem:[#allocation10 + $0x8] sm:$0xf]
    %v173 = vld [vmem:[#allocation10 + $0xc] sm:$0xff]
    %v174 = vld [vmem:[#allocation10 + $0x14] sm:$0xf]
    %v175 = vld [vmem:[#allocation10 + $0x18] sm:$0xff]
    %v176 = vld [vmem:[#allocation10 + $0x20] sm:$0xf]
    %v177 = vld [vmem:[#allocation10 + $0x24] sm:$0xff]
    %v178 = vld [vmem:[#allocation10 + $0x2c] sm:$0xf]
    %v179 = vld [vmem:[#allocation10 + $0x30] sm:$0xff]
    %v180 = vld [vmem:[#allocation10 + $0x38] sm:$0xf]
    %v181 = vld [vmem:[#allocation10 + $0x3c] sm:$0xff]
    %v182 = vld [vmem:[#allocation10 + $0x44] sm:$0xf]
    %v183 = vld [vmem:[#allocation10 + $0x48] sm:$0xff]
    %v184 = vld [vmem:[#allocation10 + $0x50] sm:$0xf]
    %v185 = vld [vmem:[#allocation10 + $0x54] sm:$0xff]
    %v186 = vld [vmem:[#allocation10 + $0x5c] sm:$0xf]
    %v187 = vld [vmem:[#allocation10 + $0x60] sm:$0xff]
    %v188 = vld [vmem:[#allocation10 + $0x68] sm:$0xf]
    %v189 = vld [vmem:[#allocation10 + $0x6c] sm:$0xff]
    %v190 = vld [vmem:[#allocation10 + $0x74] sm:$0xf]
    %v191 = vld [vmem:[#allocation10 + $0x78] sm:$0xff]
    %v192 = vld [vmem:[#allocation10 + $0x80] sm:$0xf]
    %v193 = vld [vmem:[#allocation10 + $0x84] sm:$0xff]
    %v194 = vld [vmem:[#allocation10 + $0x8c] sm:$0xf]
    %v195 = vld [vmem:[#allocation10 + $0x90] sm:$0xff]
    %v196 = vld [vmem:[#allocation10 + $0x98] sm:$0xf]
    %v197 = vld [vmem:[#allocation10 + $0x9c] sm:$0xff]
    %v198 = vld [vmem:[#allocation10 + $0xa4] sm:$0xf]
    %v199 = vld [vmem:[#allocation10 + $0xa8] sm:$0xff]
    %v200 = vld [vmem:[#allocation10 + $0xb0] sm:$0xf]
    %v201 = vld [vmem:[#allocation10 + $0xb4] sm:$0xff]
    %v202 = vld [vmem:[#allocation10 + $0xbc] sm:$0xf]
    %v203 = vld [vmem:[#allocation11] sm:$0xff]
    %v204 = vld [vmem:[#allocation11 + $0x8] sm:$0xf]
    %v205 = vld [vmem:[#allocation11 + $0xc] sm:$0xff]
    %v206 = vld [vmem:[#allocation11 + $0x14] sm:$0xf]
    %v207 = vld [vmem:[#allocation11 + $0x18] sm:$0xff]
    %v208 = vld [vmem:[#allocation11 + $0x20] sm:$0xf]
    %v209 = vld [vmem:[#allocation11 + $0x24] sm:$0xff]
    %v210 = vld [vmem:[#allocation11 + $0x2c] sm:$0xf]
    %v211 = vld [vmem:[#allocation11 + $0x30] sm:$0xff]
    %v212 = vld [vmem:[#allocation11 + $0x38] sm:$0xf]
    %v213 = vld [vmem:[#allocation11 + $0x3c] sm:$0xff]
    %v214 = vld [vmem:[#allocation11 + $0x44] sm:$0xf]
    %v215 = vld [vmem:[#allocation11 + $0x48] sm:$0xff]
    %v216 = vld [vmem:[#allocation11 + $0x50] sm:$0xf]
    %v217 = vld [vmem:[#allocation11 + $0x54] sm:$0xff]
    %v218 = vld [vmem:[#allocation11 + $0x5c] sm:$0xf]
    %v219 = vld [vmem:[#allocation11 + $0x60] sm:$0xff]
    %v220 = vld [vmem:[#allocation11 + $0x68] sm:$0xf]
    %v221 = vld [vmem:[#allocation11 + $0x6c] sm:$0xff]
    %v222 = vld [vmem:[#allocation11 + $0x74] sm:$0xf]
    %v223 = vld [vmem:[#allocation11 + $0x78] sm:$0xff]
    %v224 = vld [vmem:[#allocation11 + $0x80] sm:$0xf]
    %v225 = vld [vmem:[#allocation11 + $0x84] sm:$0xff]
    %v226 = vld [vmem:[#allocation11 + $0x8c] sm:$0xf]
    %v227 = vld [vmem:[#allocation11 + $0x90] sm:$0xff]
    %v228 = vld [vmem:[#allocation11 + $0x98] sm:$0xf]
    %v229 = vld [vmem:[#allocation11 + $0x9c] sm:$0xff]
    %v230 = vld [vmem:[#allocation11 + $0xa4] sm:$0xf]
    %v231 = vld [vmem:[#allocation11 + $0xa8] sm:$0xff]
    %v232 = vld [vmem:[#allocation11 + $0xb0] sm:$0xf]
    %v233 = vld [vmem:[#allocation11 + $0xb4] sm:$0xff]
    %v234 = vld [vmem:[#allocation11 + $0xbc] sm:$0xf]
    %v235 = vld [vmem:[%s4] sm:$0x1f]
    %v236 = vld [vmem:[%s7] sm:$0x7]
    %v237 = vld [vmem:[%s8] sm:$0x1]
    %v238 = vld [vmem:[%s9] sm:$0x1]
    %v239 = vld [vmem:[#allocation7] sm:$0xff]
    %v240 = vld [vmem:[#allocation7 + $0x8] sm:$0xff]
    %v241 = vpack.c.bf16 %v240, %v239
    %v243 = vlaneseq
    %v244 = vshrl.u32 %v243, 7
    %v245 = vsub.s32 0, %v244
    %v246 = vrot.slane %v235, %v245
    %v247 = vlaneseq
    %v248 = vshrl.u32 %v247, 7
    %v249 = vsub.s32 1, %v248
    %v250 = vrot.slane %v235, %v249
    %v251 = vlaneseq
    %v252 = vshrl.u32 %v251, 7
    %v253 = vsub.s32 2, %v252
    %v254 = vrot.slane %v235, %v253
    %v255 = vlaneseq
    %v256 = vshrl.u32 %v255, 7
    %v257 = vsub.s32 3, %v256
    %v258 = vrot.slane %v235, %v257
    %v259 = vlaneseq
    %v260 = vshrl.u32 %v259, 7
    %v261 = vsub.s32 4, %v260
    %v262 = vrot.slane %v235, %v261
    %v316 = vunpack.c.l.b16 %v123
    %v317 = vunpack.c.h.b16 %v123
    %v318 = vunpack.c.l.b16 %v124
    %v319 = vunpack.c.h.b16 %v124
    %v320 = vunpack.c.l.b16 %v125
    %v321 = vunpack.c.l.b16 %v126
    %v322 = vunpack.c.h.b16 %v126
    %v323 = vunpack.c.l.b16 %v127
    %v324 = vunpack.c.h.b16 %v127
    %v325 = vunpack.c.l.b16 %v128
    %v326 = vunpack.c.l.b16 %v129
    %v327 = vunpack.c.h.b16 %v129
    %v328 = vunpack.c.l.b16 %v130
    %v329 = vunpack.c.h.b16 %v130
    %v330 = vunpack.c.l.b16 %v131
    %v331 = vunpack.c.l.b16 %v132
    %v332 = vunpack.c.h.b16 %v132
    %v333 = vunpack.c.l.b16 %v133
    %v334 = vunpack.c.h.b16 %v133
    %v335 = vunpack.c.l.b16 %v134
    %v336 = vunpack.c.l.b16 %v135
    %v337 = vunpack.c.h.b16 %v135
    %v338 = vunpack.c.l.b16 %v136
    %v339 = vunpack.c.h.b16 %v136
    %v340 = vunpack.c.l.b16 %v137
    %v341 = vunpack.c.l.b16 %v138
    %v342 = vunpack.c.h.b16 %v138
    %v343 = vunpack.c.l.b16 %v139
    %v344 = vunpack.c.h.b16 %v139
    %v345 = vunpack.c.l.b16 %v140
    %v346 = vunpack.c.l.b16 %v141
    %v347 = vunpack.c.h.b16 %v141
    %v348 = vunpack.c.l.b16 %v142
    %v349 = vunpack.c.h.b16 %v142
    %v350 = vunpack.c.l.b16 %v143
    %v351 = vunpack.c.l.b16 %v144
    %v352 = vunpack.c.h.b16 %v144
    %v353 = vunpack.c.l.b16 %v145
    %v354 = vunpack.c.h.b16 %v145
    %v355 = vunpack.c.l.b16 %v146
    %v356 = vunpack.c.l.b16 %v147
    %v357 = vunpack.c.h.b16 %v147
    %v358 = vunpack.c.l.b16 %v148
    %v359 = vunpack.c.h.b16 %v148
    %v360 = vunpack.c.l.b16 %v149
    %v361 = vunpack.c.l.b16 %v150
    %v362 = vunpack.c.h.b16 %v150
    %v363 = vunpack.c.l.b16 %v151
    %v364 = vunpack.c.h.b16 %v151
    %v365 = vunpack.c.l.b16 %v152
    %v366 = vunpack.c.l.b16 %v153
    %v367 = vunpack.c.h.b16 %v153
    %v368 = vunpack.c.l.b16 %v154
    %v369 = vunpack.c.h.b16 %v154
    %v370 = vunpack.c.l.b16 %v155
    %v371 = vunpack.c.l.b16 %v156
    %v372 = vunpack.c.h.b16 %v156
    %v373 = vunpack.c.l.b16 %v157
    %v374 = vunpack.c.h.b16 %v157
    %v375 = vunpack.c.l.b16 %v158
    %v376 = vunpack.c.l.b16 %v159
    %v377 = vunpack.c.h.b16 %v159
    %v378 = vunpack.c.l.b16 %v160
    %v379 = vunpack.c.h.b16 %v160
    %v380 = vunpack.c.l.b16 %v161
    %v381 = vunpack.c.l.b16 %v162
    %v382 = vunpack.c.h.b16 %v162
    %v383 = vunpack.c.l.b16 %v163
    %v384 = vunpack.c.h.b16 %v163
    %v385 = vunpack.c.l.b16 %v164
    %v386 = vunpack.c.l.b16 %v165
    %v387 = vunpack.c.h.b16 %v165
    %v388 = vunpack.c.l.b16 %v166
    %v389 = vunpack.c.h.b16 %v166
    %v390 = vunpack.c.l.b16 %v167
    %v391 = vunpack.c.l.b16 %v168
    %v392 = vunpack.c.h.b16 %v168
    %v393 = vunpack.c.l.b16 %v169
    %v394 = vunpack.c.h.b16 %v169
    %v395 = vunpack.c.l.b16 %v170
    %v396 = vpack.c.b16 %v321, %v316
    %v397 = vpack.c.b16 %v322, %v317
    %v398 = vpack.c.b16 %v323, %v318
    %v399 = vpack.c.b16 %v324, %v319
    %v400 = vpack.c.b16 %v325, %v320
    %v401 = vpack.c.b16 %v331, %v326
    %v402 = vpack.c.b16 %v332, %v327
    %v403 = vpack.c.b16 %v333, %v328
    %v404 = vpack.c.b16 %v334, %v329
    %v405 = vpack.c.b16 %v335, %v330
    %v406 = vpack.c.b16 %v341, %v336
    %v407 = vpack.c.b16 %v342, %v337
    %v408 = vpack.c.b16 %v343, %v338
    %v409 = vpack.c.b16 %v344, %v339
    %v410 = vpack.c.b16 %v345, %v340
    %v411 = vpack.c.b16 %v351, %v346
    %v412 = vpack.c.b16 %v352, %v347
    %v413 = vpack.c.b16 %v353, %v348
    %v414 = vpack.c.b16 %v354, %v349
    %v415 = vpack.c.b16 %v355, %v350
    %v416 = vpack.c.b16 %v361, %v356
    %v417 = vpack.c.b16 %v362, %v357
    %v418 = vpack.c.b16 %v363, %v358
    %v419 = vpack.c.b16 %v364, %v359
    %v420 = vpack.c.b16 %v365, %v360
    %v421 = vpack.c.b16 %v371, %v366
    %v422 = vpack.c.b16 %v372, %v367
    %v423 = vpack.c.b16 %v373, %v368
    %v424 = vpack.c.b16 %v374, %v369
    %v425 = vpack.c.b16 %v375, %v370
    %v426 = vpack.c.b16 %v381, %v376
    %v427 = vpack.c.b16 %v382, %v377
    %v428 = vpack.c.b16 %v383, %v378
    %v429 = vpack.c.b16 %v384, %v379
    %v430 = vpack.c.b16 %v385, %v380
    %v431 = vpack.c.b16 %v391, %v386
    %v432 = vpack.c.b16 %v392, %v387
    %v433 = vpack.c.b16 %v393, %v388
    %v434 = vpack.c.b16 %v394, %v389
    %v435 = vpack.c.b16 %v395, %v390
    %476 = vmatprep.subr.bf16.mxu0 %v432
    %477 = vmatpush1.bf16.msra.mxu0 %v431
    %478 = vmatprep.subr.bf16.mxu0 %v427
    %479 = vmatpush1.bf16.msra.mxu0 %v426
    %480 = vmatprep.subr.bf16.mxu0 %v422
    %481 = vmatpush1.bf16.msra.mxu0 %v421
    %482 = vmatprep.subr.bf16.mxu0 %v417
    %483 = vmatpush1.bf16.msra.mxu0 %v416
    %484 = vmatprep.subr.bf16.mxu0 %v412
    %485 = vmatpush1.bf16.msra.mxu0 %v411
    %486 = vmatprep.subr.bf16.mxu0 %v407
    %487 = vmatpush1.bf16.msra.mxu0 %v406
    %488 = vmatprep.subr.bf16.mxu0 %v402
    %489 = vmatpush1.bf16.msra.mxu0 %v401
    %490 = vmatprep.subr.bf16.mxu0 %v397
    %491 = vmatpush1.bf16.msra.mxu0 %v396
    %492 = vmatprep.subr.bf16.mxu0 0
    %493 = vmatpush2.bf16.msra.mxu0 0
    %494 = vmatprep.subr.bf16.mxu0 0
    %495 = vmatpush2.bf16.msra.mxu0 0
    %496 = vmatprep.subr.bf16.mxu0 0
    %497 = vmatpush2.bf16.msra.mxu0 0
    %498 = vmatprep.subr.bf16.mxu0 0
    %499 = vmatpush2.bf16.msra.mxu0 0
    %500 = vmatprep.subr.bf16.mxu0 0
    %501 = vmatpush2.bf16.msra.mxu0 0
    %502 = vmatprep.subr.bf16.mxu0 0
    %503 = vmatpush2.bf16.msra.mxu0 0
    %504 = vmatprep.subr.bf16.mxu0 0
    %505 = vmatpush2.bf16.msra.mxu0 0
    %506 = vmatprep.subr.bf16.mxu0 0
    %507 = vmatpush2.bf16.msra.mxu0 0
    %508 = vmatprep.mubr.bf16.mxu0 0
    %509 = vmatmul.mubr.bf16.gmra.mxu0 %v241
    %v510 = vpop.f32.mrf.mxu0
    %v511 = vadd.f32 %v246, %v510
    %v512 = vpop.f32.mrf.mxu0
    %v513 = vadd.f32 %v250, %v512
    %v514 = vpop.f32.mrf.mxu0
    %v515 = vadd.f32 %v246, %v514
    %v516 = vpop.f32.mrf.mxu0
    %v517 = vadd.f32 %v250, %v516
    %518 = vdwg.mxu0
    %519 = vmatprep.subr.bf16.mxu0 %v434
    %520 = vmatpush1.bf16.msra.mxu0 %v433
    %521 = vmatprep.subr.bf16.mxu0 %v429
    %522 = vmatpush1.bf16.msra.mxu0 %v428
    %523 = vmatprep.subr.bf16.mxu0 %v424
    %524 = vmatpush1.bf16.msra.mxu0 %v423
    %525 = vmatprep.subr.bf16.mxu0 %v419
    %526 = vmatpush1.bf16.msra.mxu0 %v418
    %527 = vmatprep.subr.bf16.mxu0 %v414
    %528 = vmatpush1.bf16.msra.mxu0 %v413
    %529 = vmatprep.subr.bf16.mxu0 %v409
    %530 = vmatpush1.bf16.msra.mxu0 %v408
    %531 = vmatprep.subr.bf16.mxu0 %v404
    %532 = vmatpush1.bf16.msra.mxu0 %v403
    %533 = vmatprep.subr.bf16.mxu0 %v399
    %534 = vmatpush1.bf16.msra.mxu0 %v398
    %535 = vmatprep.subr.bf16.mxu0 0
    %536 = vmatpush2.bf16.msra.mxu0 0
    %537 = vmatprep.subr.bf16.mxu0 0
    %538 = vmatpush2.bf16.msra.mxu0 0
    %539 = vmatprep.subr.bf16.mxu0 0
    %540 = vmatpush2.bf16.msra.mxu0 0
    %541 = vmatprep.subr.bf16.mxu0 0
    %542 = vmatpush2.bf16.msra.mxu0 0
    %543 = vmatprep.subr.bf16.mxu0 0
    %544 = vmatpush2.bf16.msra.mxu0 0
    %545 = vmatprep.subr.bf16.mxu0 0
    %546 = vmatpush2.bf16.msra.mxu0 0
    %547 = vmatprep.subr.bf16.mxu0 0
    %548 = vmatpush2.bf16.msra.mxu0 0
    %549 = vmatprep.subr.bf16.mxu0 0
    %550 = vmatpush2.bf16.msra.mxu0 0
    %551 = vmatprep.mubr.bf16.mxu0 0
    %552 = vmatmul.mubr.bf16.gmra.mxu0 %v241
    %v553 = vpop.f32.mrf.mxu0
    %v554 = vadd.f32 %v254, %v553
    %v555 = vpop.f32.mrf.mxu0
    %v556 = vadd.f32 %v258, %v555
    %v557 = vpop.f32.mrf.mxu0
    %v558 = vadd.f32 %v254, %v557
    %v559 = vpop.f32.mrf.mxu0
    %v560 = vadd.f32 %v258, %v559
    %561 = vdwg.mxu0
    %562 = vmatprep.subr.bf16.mxu0 0
    %563 = vmatpush1.bf16.msra.mxu0 %v435
    %564 = vmatprep.subr.bf16.mxu0 0
    %565 = vmatpush1.bf16.msra.mxu0 %v430
    %566 = vmatprep.subr.bf16.mxu0 0
    %567 = vmatpush1.bf16.msra.mxu0 %v425
    %568 = vmatprep.subr.bf16.mxu0 0
    %569 = vmatpush1.bf16.msra.mxu0 %v420
    %570 = vmatprep.subr.bf16.mxu0 0
    %571 = vmatpush1.bf16.msra.mxu0 %v415
    %572 = vmatprep.subr.bf16.mxu0 0
    %573 = vmatpush1.bf16.msra.mxu0 %v410
    %574 = vmatprep.subr.bf16.mxu0 0
    %575 = vmatpush1.bf16.msra.mxu0 %v405
    %576 = vmatprep.subr.bf16.mxu0 0
    %577 = vmatpush1.bf16.msra.mxu0 %v400
    %578 = vmatprep.subr.bf16.mxu0 0
    %579 = vmatpush2.bf16.msra.mxu0 0
    %580 = vmatprep.subr.bf16.mxu0 0
    %581 = vmatpush2.bf16.msra.mxu0 0
    %582 = vmatprep.subr.bf16.mxu0 0
    %583 = vmatpush2.bf16.msra.mxu0 0
    %584 = vmatprep.subr.bf16.mxu0 0
    %585 = vmatpush2.bf16.msra.mxu0 0
    %586 = vmatprep.subr.bf16.mxu0 0
    %587 = vmatpush2.bf16.msra.mxu0 0
    %588 = vmatprep.subr.bf16.mxu0 0
    %589 = vmatpush2.bf16.msra.mxu0 0
    %590 = vmatprep.subr.bf16.mxu0 0
    %591 = vmatpush2.bf16.msra.mxu0 0
    %592 = vmatprep.subr.bf16.mxu0 0
    %593 = vmatpush2.bf16.msra.mxu0 0
    %594 = vmatprep.mubr.bf16.mxu0 0
    %595 = vmatmul.mubr.bf16.gmra.mxu0 %v241
    %v596 = vpop.f32.mrf.mxu0
    %v597 = vadd.f32 %v262, %v596
    %v598 = vpop.f32.mrf.mxu0
    %v599 = vpop.f32.mrf.mxu0
    %v600 = vadd.f32 %v262, %v599
    %v601 = vpop.f32.mrf.mxu0
    %602 = vdwg.mxu0
    %v603 = vpack.c.bf16 %v515, %v511
    %v605 = vunpack.c.l.b16 %v603
    %v606 = vunpack.c.h.b16 %v603
    %v607 = vpack.c.b16 %v605, %v605
    %v608 = vpack.c.b16 %v606, %v606
    %v609 = vpack.c.bf16 %v517, %v513
    %v611 = vunpack.c.l.b16 %v609
    %v612 = vunpack.c.h.b16 %v609
    %v613 = vpack.c.b16 %v611, %v611
    %v614 = vpack.c.b16 %v612, %v612
    %vm615 = vcmask 64512
    %v617 = vsel %vm615, %v119, 0
    %vm619 = vcmask 1043456
    %v621 = vsel %vm619, %v607, 0
    %623 = vmatprep.subr.bf16.mxu0 0
    %624 = vmatpush1.bf16.msra.mxu0 0
    %625 = vmatprep.subr.bf16.mxu0 0
    %626 = vmatpush1.bf16.msra.mxu0 0
    %627 = vmatprep.subr.bf16.mxu0 0
    %628 = vmatpush1.bf16.msra.mxu0 0
    %629 = vmatprep.subr.bf16.mxu0 0
    %630 = vmatpush1.bf16.msra.mxu0 0
    %631 = vmatprep.subr.bf16.mxu0 0
    %632 = vmatpush1.bf16.msra.mxu0 0
    %633 = vmatprep.subr.bf16.mxu0 0
    %634 = vmatpush1.bf16.msra.mxu0 0
    %635 = vmatprep.subr.bf16.mxu0 0
    %636 = vmatpush1.bf16.msra.mxu0 0
    %637 = vmatprep.subr.bf16.mxu0 0
    %638 = vmatpush1.bf16.msra.mxu0 %v621
    %639 = vmatprep.subr.bf16.mxu0 0
    %640 = vmatpush2.bf16.msra.mxu0 0
    %641 = vmatprep.subr.bf16.mxu0 0
    %642 = vmatpush2.bf16.msra.mxu0 0
    %643 = vmatprep.subr.bf16.mxu0 0
    %644 = vmatpush2.bf16.msra.mxu0 0
    %645 = vmatprep.subr.bf16.mxu0 0
    %646 = vmatpush2.bf16.msra.mxu0 0
    %647 = vmatprep.subr.bf16.mxu0 0
    %648 = vmatpush2.bf16.msra.mxu0 0
    %649 = vmatprep.subr.bf16.mxu0 0
    %650 = vmatpush2.bf16.msra.mxu0 0
    %651 = vmatprep.subr.bf16.mxu0 0
    %652 = vmatpush2.bf16.msra.mxu0 0
    %653 = vmatprep.subr.bf16.mxu0 0
    %654 = vmatpush2.bf16.msra.mxu0 0
    %655 = vmatprep.mubr.bf16.mxu0 0
    %656 = vmatmul.mubr.bf16.gmra.mxu0 %v617
    %v657 = vpop.f32.mrf.mxu0
    %v658 = vadd.f32 0.0, %v657
    %v659 = vpop.f32.mrf.mxu0
    %v660 = vpop.f32.mrf.mxu0
    %v661 = vpop.f32.mrf.mxu0
    %662 = vdwg.mxu0
    %v664 = vsel %vm615, %v120, 0
    %v667 = vsel %vm619, %v608, 0
    %669 = vmatprep.subr.bf16.mxu0 0
    %670 = vmatpush1.bf16.msra.mxu0 0
    %671 = vmatprep.subr.bf16.mxu0 0
    %672 = vmatpush1.bf16.msra.mxu0 0
    %673 = vmatprep.subr.bf16.mxu0 0
    %674 = vmatpush1.bf16.msra.mxu0 0
    %675 = vmatprep.subr.bf16.mxu0 0
    %676 = vmatpush1.bf16.msra.mxu0 0
    %677 = vmatprep.subr.bf16.mxu0 0
    %678 = vmatpush1.bf16.msra.mxu0 0
    %679 = vmatprep.subr.bf16.mxu0 0
    %680 = vmatpush1.bf16.msra.mxu0 0
    %681 = vmatprep.subr.bf16.mxu0 0
    %682 = vmatpush1.bf16.msra.mxu0 0
    %683 = vmatprep.subr.bf16.mxu0 0
    %684 = vmatpush1.bf16.msra.mxu0 %v667
    %685 = vmatprep.subr.bf16.mxu0 0
    %686 = vmatpush2.bf16.msra.mxu0 0
    %687 = vmatprep.subr.bf16.mxu0 0
    %688 = vmatpush2.bf16.msra.mxu0 0
    %689 = vmatprep.subr.bf16.mxu0 0
    %690 = vmatpush2.bf16.msra.mxu0 0
    %691 = vmatprep.subr.bf16.mxu0 0
    %692 = vmatpush2.bf16.msra.mxu0 0
    %693 = vmatprep.subr.bf16.mxu0 0
    %694 = vmatpush2.bf16.msra.mxu0 0
    %695 = vmatprep.subr.bf16.mxu0 0
    %696 = vmatpush2.bf16.msra.mxu0 0
    %697 = vmatprep.subr.bf16.mxu0 0
    %698 = vmatpush2.bf16.msra.mxu0 0
    %699 = vmatprep.subr.bf16.mxu0 0
    %700 = vmatpush2.bf16.msra.mxu0 0
    %701 = vmatprep.mubr.bf16.mxu0 0
    %702 = vmatmul.mubr.bf16.gmra.mxu0 %v664
    %v703 = vpop.f32.mrf.mxu0
    %v704 = vadd.f32 0.0, %v703
    %v705 = vpop.f32.mrf.mxu0
    %v706 = vpop.f32.mrf.mxu0
    %v707 = vpop.f32.mrf.mxu0
    %708 = vdwg.mxu0
    %v710 = vsel %vm615, %v121, 0
    %v713 = vsel %vm619, %v613, 0
    %715 = vmatprep.subr.bf16.mxu0 0
    %716 = vmatpush1.bf16.msra.mxu0 0
    %717 = vmatprep.subr.bf16.mxu0 0
    %718 = vmatpush1.bf16.msra.mxu0 0
    %719 = vmatprep.subr.bf16.mxu0 0
    %720 = vmatpush1.bf16.msra.mxu0 0
    %721 = vmatprep.subr.bf16.mxu0 0
    %722 = vmatpush1.bf16.msra.mxu0 0
    %723 = vmatprep.subr.bf16.mxu0 0
    %724 = vmatpush1.bf16.msra.mxu0 0
    %725 = vmatprep.subr.bf16.mxu0 0
    %726 = vmatpush1.bf16.msra.mxu0 0
    %727 = vmatprep.subr.bf16.mxu0 0
    %728 = vmatpush1.bf16.msra.mxu0 0
    %729 = vmatprep.subr.bf16.mxu0 0
    %730 = vmatpush1.bf16.msra.mxu0 %v713
    %731 = vmatprep.subr.bf16.mxu0 0
    %732 = vmatpush2.bf16.msra.mxu0 0
    %733 = vmatprep.subr.bf16.mxu0 0
    %734 = vmatpush2.bf16.msra.mxu0 0
    %735 = vmatprep.subr.bf16.mxu0 0
    %736 = vmatpush2.bf16.msra.mxu0 0
    %737 = vmatprep.subr.bf16.mxu0 0
    %738 = vmatpush2.bf16.msra.mxu0 0
    %739 = vmatprep.subr.bf16.mxu0 0
    %740 = vmatpush2.bf16.msra.mxu0 0
    %741 = vmatprep.subr.bf16.mxu0 0
    %742 = vmatpush2.bf16.msra.mxu0 0
    %743 = vmatprep.subr.bf16.mxu0 0
    %744 = vmatpush2.bf16.msra.mxu0 0
    %745 = vmatprep.subr.bf16.mxu0 0
    %746 = vmatpush2.bf16.msra.mxu0 0
    %747 = vmatprep.mubr.bf16.mxu0 0
    %748 = vmatmul.mubr.bf16.gmra.mxu0 %v710
    %v749 = vpop.f32.mrf.mxu0
    %v750 = vadd.f32 0.0, %v749
    %v751 = vpop.f32.mrf.mxu0
    %v752 = vpop.f32.mrf.mxu0
    %v753 = vpop.f32.mrf.mxu0
    %754 = vdwg.mxu0
    %v756 = vsel %vm615, %v122, 0
    %v759 = vsel %vm619, %v614, 0
    %761 = vmatprep.subr.bf16.mxu0 0
    %762 = vmatpush1.bf16.msra.mxu0 0
    %763 = vmatprep.subr.bf16.mxu0 0
    %764 = vmatpush1.bf16.msra.mxu0 0
    %765 = vmatprep.subr.bf16.mxu0 0
    %766 = vmatpush1.bf16.msra.mxu0 0
    %767 = vmatprep.subr.bf16.mxu0 0
    %768 = vmatpush1.bf16.msra.mxu0 0
    %769 = vmatprep.subr.bf16.mxu0 0
    %770 = vmatpush1.bf16.msra.mxu0 0
    %771 = vmatprep.subr.bf16.mxu0 0
    %772 = vmatpush1.bf16.msra.mxu0 0
    %773 = vmatprep.subr.bf16.mxu0 0
    %774 = vmatpush1.bf16.msra.mxu0 0
    %775 = vmatprep.subr.bf16.mxu0 0
    %776 = vmatpush1.bf16.msra.mxu0 %v759
    %777 = vmatprep.subr.bf16.mxu0 0
    %778 = vmatpush2.bf16.msra.mxu0 0
    %779 = vmatprep.subr.bf16.mxu0 0
    %780 = vmatpush2.bf16.msra.mxu0 0
    %781 = vmatprep.subr.bf16.mxu0 0
    %782 = vmatpush2.bf16.msra.mxu0 0
    %783 = vmatprep.subr.bf16.mxu0 0
    %784 = vmatpush2.bf16.msra.mxu0 0
    %785 = vmatprep.subr.bf16.mxu0 0
    %786 = vmatpush2.bf16.msra.mxu0 0
    %787 = vmatprep.subr.bf16.mxu0 0
    %788 = vmatpush2.bf16.msra.mxu0 0
    %789 = vmatprep.subr.bf16.mxu0 0
    %790 = vmatpush2.bf16.msra.mxu0 0
    %791 = vmatprep.subr.bf16.mxu0 0
    %792 = vmatpush2.bf16.msra.mxu0 0
    %793 = vmatprep.mubr.bf16.mxu0 0
    %794 = vmatmul.mubr.bf16.gmra.mxu0 %v756
    %v795 = vpop.f32.mrf.mxu0
    %v796 = vadd.f32 0.0, %v795
    %v797 = vpop.f32.mrf.mxu0
    %v798 = vpop.f32.mrf.mxu0
    %v799 = vpop.f32.mrf.mxu0
    %800 = vdwg.mxu0
    %v802 = vlaneseq
    %v803 = vshrl.u32 %v802, 7
    %v804 = vsub.s32 0, %v803
    %v805 = vrot.slane %v237, %v804
    %v807 = vadd.f32 %v658, %v805
    %v808 = vadd.f32 %v704, %v805
    %v810 = vlaneseq
    %v811 = vshrl.u32 %v810, 7
    %v812 = vsub.s32 0, %v811
    %v813 = vrot.slane %v238, %v812
    %v815 = vadd.f32 %v750, %v813
    %v816 = vadd.f32 %v796, %v813
    %v817 = vpack.c.bf16 %v808, %v807
    %v818 = vpack.c.bf16 %v816, %v815
    %v851 = vunpack.c.l.b16 %v203
    %v852 = vunpack.c.h.b16 %v203
    %v853 = vunpack.c.l.b16 %v204
    %v854 = vunpack.c.l.b16 %v205
    %v855 = vunpack.c.h.b16 %v205
    %v856 = vunpack.c.l.b16 %v206
    %v857 = vunpack.c.l.b16 %v207
    %v858 = vunpack.c.h.b16 %v207
    %v859 = vunpack.c.l.b16 %v208
    %v860 = vunpack.c.l.b16 %v209
    %v861 = vunpack.c.h.b16 %v209
    %v862 = vunpack.c.l.b16 %v210
    %v863 = vunpack.c.l.b16 %v211
    %v864 = vunpack.c.h.b16 %v211
    %v865 = vunpack.c.l.b16 %v212
    %v866 = vunpack.c.l.b16 %v213
    %v867 = vunpack.c.h.b16 %v213
    %v868 = vunpack.c.l.b16 %v214
    %v869 = vunpack.c.l.b16 %v215
    %v870 = vunpack.c.h.b16 %v215
    %v871 = vunpack.c.l.b16 %v216
    %v872 = vunpack.c.l.b16 %v217
    %v873 = vunpack.c.h.b16 %v217
    %v874 = vunpack.c.l.b16 %v218
    %v875 = vunpack.c.l.b16 %v219
    %v876 = vunpack.c.h.b16 %v219
    %v877 = vunpack.c.l.b16 %v220
    %v878 = vunpack.c.l.b16 %v221
    %v879 = vunpack.c.h.b16 %v221
    %v880 = vunpack.c.l.b16 %v222
    %v881 = vunpack.c.l.b16 %v223
    %v882 = vunpack.c.h.b16 %v223
    %v883 = vunpack.c.l.b16 %v224
    %v884 = vunpack.c.l.b16 %v225
    %v885 = vunpack.c.h.b16 %v225
    %v886 = vunpack.c.l.b16 %v226
    %v887 = vunpack.c.l.b16 %v227
    %v888 = vunpack.c.h.b16 %v227
    %v889 = vunpack.c.l.b16 %v228
    %v890 = vunpack.c.l.b16 %v229
    %v891 = vunpack.c.h.b16 %v229
    %v892 = vunpack.c.l.b16 %v230
    %v893 = vunpack.c.l.b16 %v231
    %v894 = vunpack.c.h.b16 %v231
    %v895 = vunpack.c.l.b16 %v232
    %v896 = vunpack.c.l.b16 %v233
    %v897 = vunpack.c.h.b16 %v233
    %v898 = vunpack.c.l.b16 %v234
    %v899 = vpack.c.b16 %v854, %v851
    %v900 = vpack.c.b16 %v855, %v852
    %v901 = vpack.c.b16 %v856, %v853
    %v902 = vpack.c.b16 %v860, %v857
    %v903 = vpack.c.b16 %v861, %v858
    %v904 = vpack.c.b16 %v862, %v859
    %v905 = vpack.c.b16 %v866, %v863
    %v906 = vpack.c.b16 %v867, %v864
    %v907 = vpack.c.b16 %v868, %v865
    %v908 = vpack.c.b16 %v872, %v869
    %v909 = vpack.c.b16 %v873, %v870
    %v910 = vpack.c.b16 %v874, %v871
    %v911 = vpack.c.b16 %v878, %v875
    %v912 = vpack.c.b16 %v879, %v876
    %v913 = vpack.c.b16 %v880, %v877
    %v914 = vpack.c.b16 %v884, %v881
    %v915 = vpack.c.b16 %v885, %v882
    %v916 = vpack.c.b16 %v886, %v883
    %v917 = vpack.c.b16 %v890, %v887
    %v918 = vpack.c.b16 %v891, %v888
    %v919 = vpack.c.b16 %v892, %v889
    %v920 = vpack.c.b16 %v896, %v893
    %v921 = vpack.c.b16 %v897, %v894
    %v922 = vpack.c.b16 %v898, %v895
    %947 = vmatprep.subr.bf16.mxu0 %v921
    %948 = vmatpush1.bf16.msra.mxu0 %v920
    %949 = vmatprep.subr.bf16.mxu0 %v918
    %950 = vmatpush1.bf16.msra.mxu0 %v917
    %951 = vmatprep.subr.bf16.mxu0 %v915
    %952 = vmatpush1.bf16.msra.mxu0 %v914
    %953 = vmatprep.subr.bf16.mxu0 %v912
    %954 = vmatpush1.bf16.msra.mxu0 %v911
    %955 = vmatprep.subr.bf16.mxu0 %v909
    %956 = vmatpush1.bf16.msra.mxu0 %v908
    %957 = vmatprep.subr.bf16.mxu0 %v906
    %958 = vmatpush1.bf16.msra.mxu0 %v905
    %959 = vmatprep.subr.bf16.mxu0 %v903
    %960 = vmatpush1.bf16.msra.mxu0 %v902
    %961 = vmatprep.subr.bf16.mxu0 %v900
    %962 = vmatpush1.bf16.msra.mxu0 %v899
    %963 = vmatprep.subr.bf16.mxu0 0
    %964 = vmatpush2.bf16.msra.mxu0 0
    %965 = vmatprep.subr.bf16.mxu0 0
    %966 = vmatpush2.bf16.msra.mxu0 0
    %967 = vmatprep.subr.bf16.mxu0 0
    %968 = vmatpush2.bf16.msra.mxu0 0
    %969 = vmatprep.subr.bf16.mxu0 0
    %970 = vmatpush2.bf16.msra.mxu0 0
    %971 = vmatprep.subr.bf16.mxu0 0
    %972 = vmatpush2.bf16.msra.mxu0 0
    %973 = vmatprep.subr.bf16.mxu0 0
    %974 = vmatpush2.bf16.msra.mxu0 0
    %975 = vmatprep.subr.bf16.mxu0 0
    %976 = vmatpush2.bf16.msra.mxu0 0
    %977 = vmatprep.subr.bf16.mxu0 0
    %978 = vmatpush2.bf16.msra.mxu0 0
    %979 = vmatprep.mubr.bf16.mxu0 0
    %980 = vmatmul.mubr.bf16.gmra.mxu0 %v818
    %v981 = vpop.f32.mrf.mxu0
    %v982 = vadd.f32 0.0, %v981
    %v983 = vpop.f32.mrf.mxu0
    %v984 = vadd.f32 0.0, %v983
    %v985 = vpop.f32.mrf.mxu0
    %v986 = vadd.f32 0.0, %v985
    %v987 = vpop.f32.mrf.mxu0
    %v988 = vadd.f32 0.0, %v987
    %989 = vdwg.mxu0
    %990 = vmatprep.subr.bf16.mxu0 0
    %991 = vmatpush1.bf16.msra.mxu0 %v922
    %992 = vmatprep.subr.bf16.mxu0 0
    %993 = vmatpush1.bf16.msra.mxu0 %v919
    %994 = vmatprep.subr.bf16.mxu0 0
    %995 = vmatpush1.bf16.msra.mxu0 %v916
    %996 = vmatprep.subr.bf16.mxu0 0
    %997 = vmatpush1.bf16.msra.mxu0 %v913
    %998 = vmatprep.subr.bf16.mxu0 0
    %999 = vmatpush1.bf16.msra.mxu0 %v910
    %1000 = vmatprep.subr.bf16.mxu0 0
    %1001 = vmatpush1.bf16.msra.mxu0 %v907
    %1002 = vmatprep.subr.bf16.mxu0 0
    %1003 = vmatpush1.bf16.msra.mxu0 %v904
    %1004 = vmatprep.subr.bf16.mxu0 0
    %1005 = vmatpush1.bf16.msra.mxu0 %v901
    %1006 = vmatprep.subr.bf16.mxu0 0
    %1007 = vmatpush2.bf16.msra.mxu0 0
    %1008 = vmatprep.subr.bf16.mxu0 0
    %1009 = vmatpush2.bf16.msra.mxu0 0
    %1010 = vmatprep.subr.bf16.mxu0 0
    %1011 = vmatpush2.bf16.msra.mxu0 0
    %1012 = vmatprep.subr.bf16.mxu0 0
    %1013 = vmatpush2.bf16.msra.mxu0 0
    %1014 = vmatprep.subr.bf16.mxu0 0
    %1015 = vmatpush2.bf16.msra.mxu0 0
    %1016 = vmatprep.subr.bf16.mxu0 0
    %1017 = vmatpush2.bf16.msra.mxu0 0
    %1018 = vmatprep.subr.bf16.mxu0 0
    %1019 = vmatpush2.bf16.msra.mxu0 0
    %1020 = vmatprep.subr.bf16.mxu0 0
    %1021 = vmatpush2.bf16.msra.mxu0 0
    %1022 = vmatprep.mubr.bf16.mxu0 0
    %1023 = vmatmul.mubr.bf16.gmra.mxu0 %v818
    %v1024 = vpop.f32.mrf.mxu0
    %v1025 = vadd.f32 0.0, %v1024
    %v1026 = vpop.f32.mrf.mxu0
    %v1027 = vpop.f32.mrf.mxu0
    %v1028 = vadd.f32 0.0, %v1027
    %v1029 = vpop.f32.mrf.mxu0
    %1030 = vdwg.mxu0
    %v1063 = vunpack.c.l.b16 %v171
    %v1064 = vunpack.c.h.b16 %v171
    %v1065 = vunpack.c.l.b16 %v172
    %v1066 = vunpack.c.l.b16 %v173
    %v1067 = vunpack.c.h.b16 %v173
    %v1068 = vunpack.c.l.b16 %v174
    %v1069 = vunpack.c.l.b16 %v175
    %v1070 = vunpack.c.h.b16 %v175
    %v1071 = vunpack.c.l.b16 %v176
    %v1072 = vunpack.c.l.b16 %v177
    %v1073 = vunpack.c.h.b16 %v177
    %v1074 = vunpack.c.l.b16 %v178
    %v1075 = vunpack.c.l.b16 %v179
    %v1076 = vunpack.c.h.b16 %v179
    %v1077 = vunpack.c.l.b16 %v180
    %v1078 = vunpack.c.l.b16 %v181
    %v1079 = vunpack.c.h.b16 %v181
    %v1080 = vunpack.c.l.b16 %v182
    %v1081 = vunpack.c.l.b16 %v183
    %v1082 = vunpack.c.h.b16 %v183
    %v1083 = vunpack.c.l.b16 %v184
    %v1084 = vunpack.c.l.b16 %v185
    %v1085 = vunpack.c.h.b16 %v185
    %v1086 = vunpack.c.l.b16 %v186
    %v1087 = vunpack.c.l.b16 %v187
    %v1088 = vunpack.c.h.b16 %v187
    %v1089 = vunpack.c.l.b16 %v188
    %v1090 = vunpack.c.l.b16 %v189
    %v1091 = vunpack.c.h.b16 %v189
    %v1092 = vunpack.c.l.b16 %v190
    %v1093 = vunpack.c.l.b16 %v191
    %v1094 = vunpack.c.h.b16 %v191
    %v1095 = vunpack.c.l.b16 %v192
    %v1096 = vunpack.c.l.b16 %v193
    %v1097 = vunpack.c.h.b16 %v193
    %v1098 = vunpack.c.l.b16 %v194
    %v1099 = vunpack.c.l.b16 %v195
    %v1100 = vunpack.c.h.b16 %v195
    %v1101 = vunpack.c.l.b16 %v196
    %v1102 = vunpack.c.l.b16 %v197
    %v1103 = vunpack.c.h.b16 %v197
    %v1104 = vunpack.c.l.b16 %v198
    %v1105 = vunpack.c.l.b16 %v199
    %v1106 = vunpack.c.h.b16 %v199
    %v1107 = vunpack.c.l.b16 %v200
    %v1108 = vunpack.c.l.b16 %v201
    %v1109 = vunpack.c.h.b16 %v201
    %v1110 = vunpack.c.l.b16 %v202
    %v1111 = vpack.c.b16 %v1066, %v1063
    %v1112 = vpack.c.b16 %v1067, %v1064
    %v1113 = vpack.c.b16 %v1068, %v1065
    %v1114 = vpack.c.b16 %v1072, %v1069
    %v1115 = vpack.c.b16 %v1073, %v1070
    %v1116 = vpack.c.b16 %v1074, %v1071
    %v1117 = vpack.c.b16 %v1078, %v1075
    %v1118 = vpack.c.b16 %v1079, %v1076
    %v1119 = vpack.c.b16 %v1080, %v1077
    %v1120 = vpack.c.b16 %v1084, %v1081
    %v1121 = vpack.c.b16 %v1085, %v1082
    %v1122 = vpack.c.b16 %v1086, %v1083
    %v1123 = vpack.c.b16 %v1090, %v1087
    %v1124 = vpack.c.b16 %v1091, %v1088
    %v1125 = vpack.c.b16 %v1092, %v1089
    %v1126 = vpack.c.b16 %v1096, %v1093
    %v1127 = vpack.c.b16 %v1097, %v1094
    %v1128 = vpack.c.b16 %v1098, %v1095
    %v1129 = vpack.c.b16 %v1102, %v1099
    %v1130 = vpack.c.b16 %v1103, %v1100
    %v1131 = vpack.c.b16 %v1104, %v1101
    %v1132 = vpack.c.b16 %v1108, %v1105
    %v1133 = vpack.c.b16 %v1109, %v1106
    %v1134 = vpack.c.b16 %v1110, %v1107
    %1159 = vmatprep.subr.bf16.mxu0 %v1133
    %1160 = vmatpush1.bf16.msra.mxu0 %v1132
    %1161 = vmatprep.subr.bf16.mxu0 %v1130
    %1162 = vmatpush1.bf16.msra.mxu0 %v1129
    %1163 = vmatprep.subr.bf16.mxu0 %v1127
    %1164 = vmatpush1.bf16.msra.mxu0 %v1126
    %1165 = vmatprep.subr.bf16.mxu0 %v1124
    %1166 = vmatpush1.bf16.msra.mxu0 %v1123
    %1167 = vmatprep.subr.bf16.mxu0 %v1121
    %1168 = vmatpush1.bf16.msra.mxu0 %v1120
    %1169 = vmatprep.subr.bf16.mxu0 %v1118
    %1170 = vmatpush1.bf16.msra.mxu0 %v1117
    %1171 = vmatprep.subr.bf16.mxu0 %v1115
    %1172 = vmatpush1.bf16.msra.mxu0 %v1114
    %1173 = vmatprep.subr.bf16.mxu0 %v1112
    %1174 = vmatpush1.bf16.msra.mxu0 %v1111
    %1175 = vmatprep.subr.bf16.mxu0 0
    %1176 = vmatpush2.bf16.msra.mxu0 0
    %1177 = vmatprep.subr.bf16.mxu0 0
    %1178 = vmatpush2.bf16.msra.mxu0 0
    %1179 = vmatprep.subr.bf16.mxu0 0
    %1180 = vmatpush2.bf16.msra.mxu0 0
    %1181 = vmatprep.subr.bf16.mxu0 0
    %1182 = vmatpush2.bf16.msra.mxu0 0
    %1183 = vmatprep.subr.bf16.mxu0 0
    %1184 = vmatpush2.bf16.msra.mxu0 0
    %1185 = vmatprep.subr.bf16.mxu0 0
    %1186 = vmatpush2.bf16.msra.mxu0 0
    %1187 = vmatprep.subr.bf16.mxu0 0
    %1188 = vmatpush2.bf16.msra.mxu0 0
    %1189 = vmatprep.subr.bf16.mxu0 0
    %1190 = vmatpush2.bf16.msra.mxu0 0
    %1191 = vmatprep.mubr.bf16.mxu0 0
    %1192 = vmatmul.mubr.bf16.gmra.mxu0 %v817
    %v1193 = vpop.f32.mrf.mxu0
    %v1194 = vadd.f32 %v982, %v1193
    %v1195 = vpop.f32.mrf.mxu0
    %v1196 = vadd.f32 %v984, %v1195
    %v1197 = vpop.f32.mrf.mxu0
    %v1198 = vadd.f32 %v986, %v1197
    %v1199 = vpop.f32.mrf.mxu0
    %v1200 = vadd.f32 %v988, %v1199
    %1201 = vdwg.mxu0
    %1202 = vmatprep.subr.bf16.mxu0 0
    %1203 = vmatpush1.bf16.msra.mxu0 %v1134
    %1204 = vmatprep.subr.bf16.mxu0 0
    %1205 = vmatpush1.bf16.msra.mxu0 %v1131
    %1206 = vmatprep.subr.bf16.mxu0 0
    %1207 = vmatpush1.bf16.msra.mxu0 %v1128
    %1208 = vmatprep.subr.bf16.mxu0 0
    %1209 = vmatpush1.bf16.msra.mxu0 %v1125
    %1210 = vmatprep.subr.bf16.mxu0 0
    %1211 = vmatpush1.bf16.msra.mxu0 %v1122
    %1212 = vmatprep.subr.bf16.mxu0 0
    %1213 = vmatpush1.bf16.msra.mxu0 %v1119
    %1214 = vmatprep.subr.bf16.mxu0 0
    %1215 = vmatpush1.bf16.msra.mxu0 %v1116
    %1216 = vmatprep.subr.bf16.mxu0 0
    %1217 = vmatpush1.bf16.msra.mxu0 %v1113
    %1218 = vmatprep.subr.bf16.mxu0 0
    %1219 = vmatpush2.bf16.msra.mxu0 0
    %1220 = vmatprep.subr.bf16.mxu0 0
    %1221 = vmatpush2.bf16.msra.mxu0 0
    %1222 = vmatprep.subr.bf16.mxu0 0
    %1223 = vmatpush2.bf16.msra.mxu0 0
    %1224 = vmatprep.subr.bf16.mxu0 0
    %1225 = vmatpush2.bf16.msra.mxu0 0
    %1226 = vmatprep.subr.bf16.mxu0 0
    %1227 = vmatpush2.bf16.msra.mxu0 0
    %1228 = vmatprep.subr.bf16.mxu0 0
    %1229 = vmatpush2.bf16.msra.mxu0 0
    %1230 = vmatprep.subr.bf16.mxu0 0
    %1231 = vmatpush2.bf16.msra.mxu0 0
    %1232 = vmatprep.subr.bf16.mxu0 0
    %1233 = vmatpush2.bf16.msra.mxu0 0
    %1234 = vmatprep.mubr.bf16.mxu0 0
    %1235 = vmatmul.mubr.bf16.gmra.mxu0 %v817
    %v1236 = vpop.f32.mrf.mxu0
    %v1237 = vadd.f32 %v1025, %v1236
    %v1238 = vpop.f32.mrf.mxu0
    %v1239 = vpop.f32.mrf.mxu0
    %v1240 = vadd.f32 %v1028, %v1239
    %v1241 = vpop.f32.mrf.mxu0
    %1242 = vdwg.mxu0
    %v1244 = vlaneseq
    %v1245 = vshrl.u32 %v1244, 7
    %v1246 = vsub.s32 0, %v1245
    %v1247 = vrot.slane %v236, %v1246
    %v1248 = vlaneseq
    %v1249 = vshrl.u32 %v1248, 7
    %v1250 = vsub.s32 1, %v1249
    %v1251 = vrot.slane %v236, %v1250
    %v1252 = vlaneseq
    %v1253 = vshrl.u32 %v1252, 7
    %v1254 = vsub.s32 2, %v1253
    %v1255 = vrot.slane %v236, %v1254
    %v1259 = vadd.f32 %v1194, %v1247
    %v1260 = vadd.f32 %v1196, %v1251
    %v1261 = vadd.f32 %v1237, %v1255
    %v1262 = vadd.f32 %v1198, %v1247
    %v1263 = vadd.f32 %v1200, %v1251
    %v1264 = vadd.f32 %v1240, %v1255
    %v1265 = vadd.f32 %v1259, %v554
    %v1266 = vadd.f32 %v1262, %v558
    %v1267 = vxor.u32 %v1265, 2147483648
    %v1268 = vxor.u32 %v1266, 2147483648
    %v1269 = vmul.f32 %v1267, 1.442695
    %v1270 = vpow.pop %v1269
    %v1271 = vmul.f32 %v1268, 1.442695
    %v1272 = vpow.pop %v1271
    %v1273 = vadd.f32 %v1270, 1.0
    %v1274 = vadd.f32 %v1272, 1.0
    %v1275 = vrcp.pop %v1273
    %v1276 = vmul.f32 1.0, %v1275
    %v1277 = vrcp.pop %v1274
    %v1278 = vmul.f32 1.0, %v1277
    %v1279 = vadd.f32 %v1260, %v556
    %v1280 = vadd.f32 %v1263, %v560
    %v1281 = vxor.u32 %v1279, 2147483648
    %v1282 = vxor.u32 %v1280, 2147483648
    %v1283 = vmul.f32 %v1281, 1.442695
    %v1284 = vpow.pop %v1283
    %v1285 = vmul.f32 %v1282, 1.442695
    %v1286 = vpow.pop %v1285
    %v1287 = vadd.f32 %v1284, 1.0
    %v1288 = vadd.f32 %v1286, 1.0
    %v1289 = vrcp.pop %v1287
    %v1290 = vmul.f32 1.0, %v1289
    %v1291 = vrcp.pop %v1288
    %v1292 = vmul.f32 1.0, %v1291
    %v1293 = vmul.f32 %v1276, %v597
    %v1294 = vmul.f32 %v1278, %v600
    %v1295 = vadd.f32 %v1261, %v1293
    %v1296 = vadd.f32 %v1264, %v1294
    %v1297 = vtanh.pop %v1295
    %v1298 = vtanh.pop %v1296
    %v1299 = vsub.f32 %v239, %v1297
    %v1300 = vsub.f32 %v240, %v1298
    %v1301 = vmul.f32 %v1290, %v1299
    %v1302 = vmul.f32 %v1292, %v1300
    %v1303 = vadd.f32 %v1297, %v1301
    %v1304 = vadd.f32 %v1298, %v1302
    %1305 = vst [vmem:[#allocation13] sm:$0xff] %v1303
    %1306 = vst [vmem:[#allocation13 + $0x8] sm:$0xff] %v1304
    // Predicated region
    $region66: #{tpu_custom_call.1} parent=1 // pred_check
      _
    $region67: #{tpu_custom_call.1} parent=1 // pred_check_branch
      %1308 = sbr.rel (0) target = $region69
    $region68: #{tpu_custom_call.1} parent=1 // pred_region
      %s1310 = ssub.s32 256, 256
      %1311 = vsyncadd [#allocation4], %s1310
      %s1312 = sshll.u32 [#allocation13], 4
      %s1313 = int_to_ptr.vmem [resolvable:$true] %s1312
      %1318 = dma.vmem_to_hbm [thread:$0]  %s1313, 256, %s10, [#allocation4], 128, 128, 8
    $region69: #{tpu_custom_call.1} parent=1 // pred_fallthru
      _
    // Predicated region
    $region70: #{tpu_custom_call.1} parent=1 // pred_check
      _
    $region71: #{tpu_custom_call.1} parent=1 // pred_check_branch
      %1320 = sbr.rel (0) target = $region73
    $region72: #{tpu_custom_call.1} parent=1 // pred_region
      %1321 = dma.done [#allocation4], 256
    $region73: #{tpu_custom_call.1} parent=1 // pred_fallthru
      _
    %1322 = vsyncpa [#allocation3], 1
    %1323 = vsyncpa [#allocation6], 1
    %1324 = vsyncpa [#allocation9], 1
    %1325 = vsyncpa [#allocation12], 1
    %1326 = vsyncpa [#allocation4], 1

</llo_original>
